<compile_context>
chip_gen: v7x
topology: tpu7x:2x2x1
jax: 0.10.0
libtpu: 0.0.40
codegen_flags: <defaults>
</compile_context>

<pallas_src>
import functools

import jax
import jax.numpy as jnp
from jax.experimental import pallas as pl
from jax.experimental.pallas import tpu as pltpu

K = 5                     # conv kernel size (5x5x5, padding=2)
OUT_CH = 16               # output channels


def _conv_stats_kernel(xp_ref, w_ref, conv_ref, stats_ref, patch_ref,
                       *, Dt, G, H, W):
    # xp_ref:    (1, DP, HPW_pad)   depth/height zero-padded planes, each
    #                               plane flattened (2 leading zeros + data)
    # w_ref:     (Dt*16, KP)        stacked conv weights (+ bias column)
    # conv_ref:  (1, Dt, 16, H*W)   conv(+bias) output block
    # stats_ref: (1, 1, Dt*16, 2)   per-row [sum, sum-of-squares]
    # patch_ref: (KP, H*W)          shared im2col patch (VMEM scratch)
    HW = H * W
    d0 = pl.program_id(1) * Dt
    if Dt % 8 == 0:
        d0 = pl.multiple_of(d0, 8)

    # Width-tap validity masks (output col w is valid iff 0 <= w+dw < W).
    col = jax.lax.broadcasted_iota(jnp.int32, (1, HW), 1) % W
    masks = {dw: (col + dw >= 0) & (col + dw < W) for dw in (-2, -1, 1, 2)}

    # Bias group: row 25*G is all ones (matches the bias column of w_ref),
    # the remaining 7 pad rows are zero.  One aligned 8-row store per step.
    patch_ref[K * K * G:K * K * G + 8, :] = jnp.concatenate(
        [jnp.ones((1, HW), jnp.float32), jnp.zeros((7, HW), jnp.float32)],
        axis=0)

    # Depth-reuse im2col: each (kh, kw) tap is ONE contiguous (G, HW) load of
    # G padded depth planes and ONE aligned (G, HW) store into the tap-major
    # patch (row = tap*G + local_plane).  Every row written is finite data.
    for kh in range(K):
        for kw in range(K):
            start = kh * W + kw                     # includes the +2 front pad
            r = xp_ref[0, pl.ds(d0, G), pl.ds(start, HW)]        # (G, HW)
            dw = kw - 2
            if dw != 0:
                r = jnp.where(masks[dw], r, 0.0)                 # W zero-pad
            tap = kh * K + kw
            patch_ref[tap * G:(tap + 1) * G, :] = r

    # One matmul: all Dt output planes x 16 channels share the same patch RHS.
    res = jnp.dot(w_ref[...], patch_ref[...],
                  preferred_element_type=jnp.float32)            # (Dt*16, HW)
    conv_ref[...] = res.reshape(1, Dt, OUT_CH, HW)               # dense store
    sums = jnp.sum(res, axis=1, keepdims=True)                   # (Dt*16, 1)
    sqs = jnp.sum(res * res, axis=1, keepdims=True)
    stats_ref[0, 0, :, :] = jnp.concatenate([sums, sqs], axis=1)


def _bn_skip_elu_kernel(conv_ref, x_ref, scale_ref, shift_ref, o_ref, *, Dt):
    # conv_ref: (1, Dt, 16, HW), x_ref: (1, Dt, 1, HW)
    # scale_ref / shift_ref: (16,) f32 in SMEM (per-channel scalars).
    # o_ref:    (1, 16, Dt, HW)  -> channel-major == NCDHW after free reshape
    xs = x_ref[0, :, 0, :]                                       # (Dt, HW)
    for c in range(OUT_CH):
        y = conv_ref[0, :, c, :] * scale_ref[c] + shift_ref[c]   # folded BN
        y = y + xs                                               # cat(x*16)
        y = jnp.where(y > 0.0, y, jnp.exp(jnp.minimum(y, 0.0)) - 1.0)   # ELU
        o_ref[0, c, :, :] = y                     # full (Dt, HW) dense store


def input_transition_forward(x, w, b, gamma, beta, eps=1e-5):
    N, C, D, H, W = x.shape
    assert C == 1
    x = x.astype(jnp.float32)
    HW = H * W

    # Depth tiling: Dt output planes per grid step.  Dt must be a multiple of
    # 8 (or equal D) so the channel-major output block obeys (8,128) tiling.
    # TODO(synk): for large D with D % 8 != 0, add a remainder block instead
    # of falling back to Dt = D (VMEM pressure).
    Dt = 8 if D % 8 == 0 else D
    DB = D // Dt
    G = ((Dt + 4 + 7) // 8) * 8           # padded depth planes loaded per tap
    KP = K * K * G + 8                    # contraction: 25 tap groups + bias

    # ---- cheap XLA glue on the 1-channel input: pad D/H, flatten planes ----
    DP = D - Dt + G                       # padded depth planes (2 front zeros)
    HPW = (H + 4) * W
    HPW_pad = ((HPW + 4 + 127) // 128) * 128
    xph = jnp.pad(x[:, 0], ((0, 0), (2, DP - D - 2), (2, 2), (0, 0)))
    xp_flat = jnp.pad(xph.reshape(N, DP, HPW),
                      ((0, 0), (0, 0), (2, HPW_pad - HPW - 2)))

    # ---- stacked conv weights: row dl*16+oc, col tap*G + i  (i = local
    #      padded-depth plane; nonzero iff 0 <= i-dl < 5), plus a bias col ----
    w5 = w[:, 0].astype(jnp.float32)                        # (16, kd, kh, kw)
    wtap = jnp.transpose(w5, (2, 3, 0, 1)).reshape(K * K, OUT_CH, K)
    kd = jnp.arange(G)[None, :] - jnp.arange(Dt)[:, None]   # (Dt, G)
    valid = (kd >= 0) & (kd < K)
    blk = wtap[:, :, jnp.clip(kd, 0, K - 1)]                # (25, 16, Dt, G)
    blk = jnp.where(valid[None, None], blk, 0.0)
    w_data = jnp.transpose(blk, (2, 1, 0, 3)).reshape(Dt * OUT_CH, K * K * G)
    bias_col = jnp.tile(b.astype(jnp.float32), Dt)[:, None]
    w_stack = jnp.concatenate(
        [w_data, bias_col, jnp.zeros((Dt * OUT_CH, 7), jnp.float32)], axis=1)

    vmem1 = 4 * (2 * DP * HPW_pad + 2 * Dt * OUT_CH * KP
                 + 2 * Dt * OUT_CH * HW + KP * HW + 4 * Dt * OUT_CH)
    conv_out, stats = pl.pallas_call(
        functools.partial(_conv_stats_kernel, Dt=Dt, G=G, H=H, W=W),
        out_shape=(jax.ShapeDtypeStruct((N, D, OUT_CH, HW), jnp.float32),
                   jax.ShapeDtypeStruct((N, DB, Dt * OUT_CH, 2), jnp.float32)),
        grid_spec=pltpu.PrefetchScalarGridSpec(
            num_scalar_prefetch=0,
            grid=(N, DB),
            in_specs=[
                # Resident padded input (block index never changes along d).
                # TODO(synk): pipeline_mode=pl.Buffered(1) here would halve
                # this block's VMEM (useful on v7x at large volumes).
                pl.BlockSpec((1, DP, HPW_pad), lambda n, d: (n, 0, 0)),
                pl.BlockSpec((Dt * OUT_CH, KP), lambda n, d: (0, 0)),
            ],
            out_specs=[
                pl.BlockSpec((1, Dt, OUT_CH, HW), lambda n, d: (n, d, 0, 0)),
                pl.BlockSpec((1, 1, Dt * OUT_CH, 2), lambda n, d: (n, d, 0, 0)),
            ],
            scratch_shapes=[pltpu.VMEM((KP, HW), jnp.float32)],
        ),
        compiler_params=pltpu.CompilerParams(
            dimension_semantics=("parallel", "parallel"),
            # Clamped to 48 MiB so it also fits v7x's 64 MiB physical VMEM.
            vmem_limit_bytes=int(min(48 << 20, max(32 << 20, 2 * vmem1)))),
    )(xp_flat, w_stack)

    # ---- BatchNorm3d (training-mode batch stats): tiny final reduction. ----
    cnt = jnp.float32(N * D * HW)
    s1 = jnp.sum(stats[..., 0].reshape(N, DB, Dt, OUT_CH), axis=(0, 1, 2))
    s2 = jnp.sum(stats[..., 1].reshape(N, DB, Dt, OUT_CH), axis=(0, 1, 2))
    mean = s1 / cnt
    var = jnp.maximum(s2 / cnt - mean * mean, 0.0)            # biased variance
    scale = gamma.astype(jnp.float32) / jnp.sqrt(var + eps)   # (16,)
    shift = beta.astype(jnp.float32) - mean * scale           # (16,)

    x_skip = x[:, 0].reshape(N, D, 1, HW)                     # free reshape

    vmem2 = 4 * 2 * (Dt * OUT_CH * HW + Dt * HW + OUT_CH * Dt * HW) + 4096
    out = pl.pallas_call(
        functools.partial(_bn_skip_elu_kernel, Dt=Dt),
        out_shape=jax.ShapeDtypeStruct((N, OUT_CH, D, HW), jnp.float32),
        grid_spec=pltpu.PrefetchScalarGridSpec(
            num_scalar_prefetch=0,
            grid=(N, DB),
            in_specs=[
                pl.BlockSpec((1, Dt, OUT_CH, HW), lambda n, d: (n, d, 0, 0)),
                pl.BlockSpec((1, Dt, 1, HW), lambda n, d: (n, d, 0, 0)),
                pl.BlockSpec(memory_space=pltpu.MemorySpace.SMEM),
                pl.BlockSpec(memory_space=pltpu.MemorySpace.SMEM),
            ],
            out_specs=pl.BlockSpec((1, OUT_CH, Dt, HW),
                                   lambda n, d: (n, 0, d, 0)),
        ),
        compiler_params=pltpu.CompilerParams(
            dimension_semantics=("parallel", "parallel"),
            vmem_limit_bytes=int(min(48 << 20, max(32 << 20, 2 * vmem2)))),
    )(conv_out, x_skip, scale, shift)

    # [N, 16, D, H*W] -> NCDHW is a free reshape (no transpose / extra pass).
    return out.reshape(N, OUT_CH, D, H, W)


def _reference(x, w, b, gamma, beta, eps=1e-5):
    dn = jax.lax.conv_dimension_numbers(x.shape, w.shape,
                                        ('NCDHW', 'OIDHW', 'NCDHW'))
    conv = jax.lax.conv_general_dilated(
        x, w, window_strides=(1, 1, 1),
        padding=((2, 2), (2, 2), (2, 2)), dimension_numbers=dn,
        precision=jax.lax.Precision.HIGHEST)
    conv = conv + b.reshape(1, OUT_CH, 1, 1, 1)
    mean = jnp.mean(conv, axis=(0, 2, 3, 4), keepdims=True)
    var = jnp.var(conv, axis=(0, 2, 3, 4), keepdims=True)
    norm = (conv - mean) / jnp.sqrt(var + eps)
    norm = (norm * gamma.reshape(1, OUT_CH, 1, 1, 1)
            + beta.reshape(1, OUT_CH, 1, 1, 1))
    x16 = jnp.concatenate([x] * 16, axis=1)
    y = norm + x16
    return jnp.where(y > 0.0, y, jnp.exp(jnp.minimum(y, 0.0)) - 1.0)


if __name__ == "__main__":
    key = jax.random.PRNGKey(0)
    kx, kw, kb, kg, kbe = jax.random.split(key, 5)
    N, C, D, H, W = 2, 1, 16, 16, 16
    x = jax.random.normal(kx, (N, C, D, H, W), jnp.float32)
    # Shapes from nn.Conv3d(1, 16, 5, padding=2) / nn.BatchNorm3d(16).
    w = jax.random.normal(kw, (OUT_CH, 1, K, K, K), jnp.float32) * 0.1
    b = jax.random.normal(kb, (OUT_CH,), jnp.float32) * 0.1
    gamma = 1.0 + 0.1 * jax.random.normal(kg, (OUT_CH,), jnp.float32)
    beta = 0.1 * jax.random.normal(kbe, (OUT_CH,), jnp.float32)
    # elu=True branch of ELUCons (nn.ELU); PReLU branch not exercised.

    out = jax.block_until_ready(input_transition_forward(x, w, b, gamma, beta))

    ref = _reference(x, w, b, gamma, beta)
    assert out.shape == (N, OUT_CH, D, H, W)
    err = float(jnp.max(jnp.abs(out - ref)))
    assert jnp.allclose(out, ref, rtol=1e-3, atol=1e-3), err
    print("KERNEL_OK")
</pallas_src>

<mosaic_0001>
module attributes {stable_mosaic.version = 11 : i64} {
  func.func @_conv_stats_kernel(%arg0: i32, %arg1: i32, %arg2: memref<1x24x384xf32, #tpu.memory_space<vmem>>, %arg3: memref<128x408xf32, #tpu.memory_space<vmem>>, %arg4: memref<1x8x16x256xf32, #tpu.memory_space<vmem>>, %arg5: memref<1x1x128x2xf32, #tpu.memory_space<vmem>>, %arg6: memref<408x256xf32, #tpu.memory_space<vmem>>) attributes {dimension_semantics = [#tpu.dimension_semantics<parallel>, #tpu.dimension_semantics<parallel>], iteration_bounds = array<i64: 2, 2>, scalar_prefetch = 0 : i64, scratch_operands = 1 : i64, tpu.core_type = #tpu.core_type<tc>, window_params = [{transform_indices = @transform_0, window_bounds = array<i64: 1, 24, 384>}, {pipeline_mode = #tpu.pipeline_mode<synchronous>, transform_indices = @transform_1, window_bounds = array<i64: 128, 408>}, {transform_indices = @transform_2, window_bounds = array<i64: 1, 8, 16, 256>}, {transform_indices = @transform_3, window_bounds = array<i64: 1, 1, 128, 2>}]} {
    %c8_i32 = arith.constant 8 : i32
    %0 = arith.muli %arg1, %c8_i32 : i32
    %1 = tpu.assume_multiple %0, 8 : i32
    %2 = tpu.iota {dimensions = array<i32: 1>} : vector<1x256xi32>
    %c16_i32 = arith.constant 16 : i32
    %c0_i32 = arith.constant 0 : i32
    %3 = arith.cmpi eq, %c16_i32, %c0_i32 : i32
    %c1_i32 = arith.constant 1 : i32
    %4 = arith.select %3, %c1_i32, %c16_i32 : i32
    %5 = vector.broadcast %4 : i32 to vector<1x256xi32>
    %6 = arith.remsi %2, %5 : vector<1x256xi32>
    %c0_i32_0 = arith.constant 0 : i32
    %7 = vector.broadcast %c0_i32_0 : i32 to vector<1x256xi32>
    %8 = arith.cmpi ne, %6, %7 : vector<1x256xi32>
    %c0_i32_1 = arith.constant 0 : i32
    %9 = vector.broadcast %c0_i32_1 : i32 to vector<1x256xi32>
    %10 = arith.cmpi slt, %6, %9 : vector<1x256xi32>
    %c0_i32_2 = arith.constant 0 : i32
    %11 = arith.cmpi slt, %4, %c0_i32_2 : i32
    %12 = vector.broadcast %11 : i1 to vector<1x256xi1>
    %13 = vector.broadcast %12 : vector<1x256xi1> to vector<1x256xi1>
    %14 = arith.xori %10, %13 : vector<1x256xi1>
    %15 = arith.andi %14, %8 : vector<1x256xi1>
    %16 = vector.broadcast %4 : i32 to vector<1x256xi32>
    %17 = arith.addi %6, %16 : vector<1x256xi32>
    %18 = arith.select %15, %17, %6 : vector<1x256xi1>, vector<1x256xi32>
    %c-2_i32 = arith.constant -2 : i32
    %19 = vector.broadcast %c-2_i32 : i32 to vector<1x256xi32>
    %20 = arith.addi %18, %19 : vector<1x256xi32>
    %c0_i32_3 = arith.constant 0 : i32
    %21 = vector.broadcast %c0_i32_3 : i32 to vector<1x256xi32>
    %22 = arith.cmpi sge, %20, %21 : vector<1x256xi32>
    %c-2_i32_4 = arith.constant -2 : i32
    %23 = vector.broadcast %c-2_i32_4 : i32 to vector<1x256xi32>
    %24 = arith.addi %18, %23 : vector<1x256xi32>
    %c16_i32_5 = arith.constant 16 : i32
    %25 = vector.broadcast %c16_i32_5 : i32 to vector<1x256xi32>
    %26 = arith.cmpi slt, %24, %25 : vector<1x256xi32>
    %27 = arith.andi %22, %26 : vector<1x256xi1>
    %c-1_i32 = arith.constant -1 : i32
    %28 = vector.broadcast %c-1_i32 : i32 to vector<1x256xi32>
    %29 = arith.addi %18, %28 : vector<1x256xi32>
    %c0_i32_6 = arith.constant 0 : i32
    %30 = vector.broadcast %c0_i32_6 : i32 to vector<1x256xi32>
    %31 = arith.cmpi sge, %29, %30 : vector<1x256xi32>
    %c-1_i32_7 = arith.constant -1 : i32
    %32 = vector.broadcast %c-1_i32_7 : i32 to vector<1x256xi32>
    %33 = arith.addi %18, %32 : vector<1x256xi32>
    %c16_i32_8 = arith.constant 16 : i32
    %34 = vector.broadcast %c16_i32_8 : i32 to vector<1x256xi32>
    %35 = arith.cmpi slt, %33, %34 : vector<1x256xi32>
    %36 = arith.andi %31, %35 : vector<1x256xi1>
    %c1_i32_9 = arith.constant 1 : i32
    %37 = vector.broadcast %c1_i32_9 : i32 to vector<1x256xi32>
    %38 = arith.addi %18, %37 : vector<1x256xi32>
    %c0_i32_10 = arith.constant 0 : i32
    %39 = vector.broadcast %c0_i32_10 : i32 to vector<1x256xi32>
    %40 = arith.cmpi sge, %38, %39 : vector<1x256xi32>
    %c1_i32_11 = arith.constant 1 : i32
    %41 = vector.broadcast %c1_i32_11 : i32 to vector<1x256xi32>
    %42 = arith.addi %18, %41 : vector<1x256xi32>
    %c16_i32_12 = arith.constant 16 : i32
    %43 = vector.broadcast %c16_i32_12 : i32 to vector<1x256xi32>
    %44 = arith.cmpi slt, %42, %43 : vector<1x256xi32>
    %45 = arith.andi %40, %44 : vector<1x256xi1>
    %c2_i32 = arith.constant 2 : i32
    %46 = vector.broadcast %c2_i32 : i32 to vector<1x256xi32>
    %47 = arith.addi %18, %46 : vector<1x256xi32>
    %c0_i32_13 = arith.constant 0 : i32
    %48 = vector.broadcast %c0_i32_13 : i32 to vector<1x256xi32>
    %49 = arith.cmpi sge, %47, %48 : vector<1x256xi32>
    %c2_i32_14 = arith.constant 2 : i32
    %50 = vector.broadcast %c2_i32_14 : i32 to vector<1x256xi32>
    %51 = arith.addi %18, %50 : vector<1x256xi32>
    %c16_i32_15 = arith.constant 16 : i32
    %52 = vector.broadcast %c16_i32_15 : i32 to vector<1x256xi32>
    %53 = arith.cmpi slt, %51, %52 : vector<1x256xi32>
    %54 = arith.andi %49, %53 : vector<1x256xi1>
    %cst = arith.constant 1.000000e+00 : f32
    %55 = vector.broadcast %cst : f32 to vector<1x256xf32>
    %cst_16 = arith.constant 0.000000e+00 : f32
    %56 = vector.broadcast %cst_16 : f32 to vector<7x256xf32>
    %57 = tpu.concatenate %55, %56 in 0 : vector<1x256xf32>, vector<7x256xf32> -> vector<8x256xf32>
    %c400 = arith.constant 400 : index
    %c0 = arith.constant 0 : index
    %58 = vector.load %arg6[%c400, %c0] : memref<408x256xf32, #tpu.memory_space<vmem>>, vector<8x256xf32>
    tpu.vector_store %arg6[%c400, %c0], %57 {strides = array<i32>} : memref<408x256xf32, #tpu.memory_space<vmem>>, vector<8x256xf32>,
    %c0_17 = arith.constant 0 : index
    %59 = arith.index_cast %1 : i32 to index
    %c0_18 = arith.constant 0 : index
    %60 = vector.load %arg2[%c0_17, %59, %c0_18] : memref<1x24x384xf32, #tpu.memory_space<vmem>>, vector<1x16x256xf32>
    %61 = vector.shape_cast %60 : vector<1x16x256xf32> to vector<16x256xf32>
    %cst_19 = arith.constant 0.000000e+00 : f32
    %62 = vector.shape_cast %27 : vector<1x256xi1> to vector<1x256xi1>
    %63 = vector.broadcast %62 : vector<1x256xi1> to vector<16x256xi1>
    %64 = vector.broadcast %cst_19 : f32 to vector<16x256xf32>
    %65 = arith.select %63, %61, %64 : vector<16x256xi1>, vector<16x256xf32>
    %c0_20 = arith.constant 0 : index
    %c0_21 = arith.constant 0 : index
    %66 = vector.load %arg6[%c0_20, %c0_21] : memref<408x256xf32, #tpu.memory_space<vmem>>, vector<16x256xf32>
    tpu.vector_store %arg6[%c0_20, %c0_21], %65 {strides = array<i32>} : memref<408x256xf32, #tpu.memory_space<vmem>>, vector<16x256xf32>,
    %c0_22 = arith.constant 0 : index
    %67 = arith.index_cast %1 : i32 to index
    %c1 = arith.constant 1 : index
    %68 = vector.load %arg2[%c0_22, %67, %c1] : memref<1x24x384xf32, #tpu.memory_space<vmem>>, vector<1x16x256xf32>
    %69 = vector.shape_cast %68 : vector<1x16x256xf32> to vector<16x256xf32>
    %cst_23 = arith.constant 0.000000e+00 : f32
    %70 = vector.shape_cast %36 : vector<1x256xi1> to vector<1x256xi1>
    %71 = vector.broadcast %70 : vector<1x256xi1> to vector<16x256xi1>
    %72 = vector.broadcast %cst_23 : f32 to vector<16x256xf32>
    %73 = arith.select %71, %69, %72 : vector<16x256xi1>, vector<16x256xf32>
    %c16 = arith.constant 16 : index
    %c0_24 = arith.constant 0 : index
    %74 = vector.load %arg6[%c16, %c0_24] : memref<408x256xf32, #tpu.memory_space<vmem>>, vector<16x256xf32>
    tpu.vector_store %arg6[%c16, %c0_24], %73 {strides = array<i32>} : memref<408x256xf32, #tpu.memory_space<vmem>>, vector<16x256xf32>,
    %c0_25 = arith.constant 0 : index
    %75 = arith.index_cast %1 : i32 to index
    %c2 = arith.constant 2 : index
    %76 = vector.load %arg2[%c0_25, %75, %c2] : memref<1x24x384xf32, #tpu.memory_space<vmem>>, vector<1x16x256xf32>
    %77 = vector.shape_cast %76 : vector<1x16x256xf32> to vector<16x256xf32>
    %c32 = arith.constant 32 : index
    %c0_26 = arith.constant 0 : index
    %78 = vector.load %arg6[%c32, %c0_26] : memref<408x256xf32, #tpu.memory_space<vmem>>, vector<16x256xf32>
    tpu.vector_store %arg6[%c32, %c0_26], %77 {strides = array<i32>} : memref<408x256xf32, #tpu.memory_space<vmem>>, vector<16x256xf32>,
    %c0_27 = arith.constant 0 : index
    %79 = arith.index_cast %1 : i32 to index
    %c3 = arith.constant 3 : index
    %80 = vector.load %arg2[%c0_27, %79, %c3] : memref<1x24x384xf32, #tpu.memory_space<vmem>>, vector<1x16x256xf32>
    %81 = vector.shape_cast %80 : vector<1x16x256xf32> to vector<16x256xf32>
    %cst_28 = arith.constant 0.000000e+00 : f32
    %82 = vector.shape_cast %45 : vector<1x256xi1> to vector<1x256xi1>
    %83 = vector.broadcast %82 : vector<1x256xi1> to vector<16x256xi1>
    %84 = vector.broadcast %cst_28 : f32 to vector<16x256xf32>
    %85 = arith.select %83, %81, %84 : vector<16x256xi1>, vector<16x256xf32>
    %c48 = arith.constant 48 : index
    %c0_29 = arith.constant 0 : index
    %86 = vector.load %arg6[%c48, %c0_29] : memref<408x256xf32, #tpu.memory_space<vmem>>, vector<16x256xf32>
    tpu.vector_store %arg6[%c48, %c0_29], %85 {strides = array<i32>} : memref<408x256xf32, #tpu.memory_space<vmem>>, vector<16x256xf32>,
    %c0_30 = arith.constant 0 : index
    %87 = arith.index_cast %1 : i32 to index
    %c4 = arith.constant 4 : index
    %88 = vector.load %arg2[%c0_30, %87, %c4] : memref<1x24x384xf32, #tpu.memory_space<vmem>>, vector<1x16x256xf32>
    %89 = vector.shape_cast %88 : vector<1x16x256xf32> to vector<16x256xf32>
    %cst_31 = arith.constant 0.000000e+00 : f32
    %90 = vector.shape_cast %54 : vector<1x256xi1> to vector<1x256xi1>
    %91 = vector.broadcast %90 : vector<1x256xi1> to vector<16x256xi1>
    %92 = vector.broadcast %cst_31 : f32 to vector<16x256xf32>
    %93 = arith.select %91, %89, %92 : vector<16x256xi1>, vector<16x256xf32>
    %c64 = arith.constant 64 : index
    %c0_32 = arith.constant 0 : index
    %94 = vector.load %arg6[%c64, %c0_32] : memref<408x256xf32, #tpu.memory_space<vmem>>, vector<16x256xf32>
    tpu.vector_store %arg6[%c64, %c0_32], %93 {strides = array<i32>} : memref<408x256xf32, #tpu.memory_space<vmem>>, vector<16x256xf32>,
    %c0_33 = arith.constant 0 : index
    %95 = arith.index_cast %1 : i32 to index
    %c16_34 = arith.constant 16 : index
    %96 = vector.load %arg2[%c0_33, %95, %c16_34] : memref<1x24x384xf32, #tpu.memory_space<vmem>>, vector<1x16x256xf32>
    %97 = vector.shape_cast %96 : vector<1x16x256xf32> to vector<16x256xf32>
    %cst_35 = arith.constant 0.000000e+00 : f32
    %98 = vector.shape_cast %27 : vector<1x256xi1> to vector<1x256xi1>
    %99 = vector.broadcast %98 : vector<1x256xi1> to vector<16x256xi1>
    %100 = vector.broadcast %cst_35 : f32 to vector<16x256xf32>
    %101 = arith.select %99, %97, %100 : vector<16x256xi1>, vector<16x256xf32>
    %c80 = arith.constant 80 : index
    %c0_36 = arith.constant 0 : index
    %102 = vector.load %arg6[%c80, %c0_36] : memref<408x256xf32, #tpu.memory_space<vmem>>, vector<16x256xf32>
    tpu.vector_store %arg6[%c80, %c0_36], %101 {strides = array<i32>} : memref<408x256xf32, #tpu.memory_space<vmem>>, vector<16x256xf32>,
    %c0_37 = arith.constant 0 : index
    %103 = arith.index_cast %1 : i32 to index
    %c17 = arith.constant 17 : index
    %104 = vector.load %arg2[%c0_37, %103, %c17] : memref<1x24x384xf32, #tpu.memory_space<vmem>>, vector<1x16x256xf32>
    %105 = vector.shape_cast %104 : vector<1x16x256xf32> to vector<16x256xf32>
    %cst_38 = arith.constant 0.000000e+00 : f32
    %106 = vector.shape_cast %36 : vector<1x256xi1> to vector<1x256xi1>
    %107 = vector.broadcast %106 : vector<1x256xi1> to vector<16x256xi1>
    %108 = vector.broadcast %cst_38 : f32 to vector<16x256xf32>
    %109 = arith.select %107, %105, %108 : vector<16x256xi1>, vector<16x256xf32>
    %c96 = arith.constant 96 : index
    %c0_39 = arith.constant 0 : index
    %110 = vector.load %arg6[%c96, %c0_39] : memref<408x256xf32, #tpu.memory_space<vmem>>, vector<16x256xf32>
    tpu.vector_store %arg6[%c96, %c0_39], %109 {strides = array<i32>} : memref<408x256xf32, #tpu.memory_space<vmem>>, vector<16x256xf32>,
    %c0_40 = arith.constant 0 : index
    %111 = arith.index_cast %1 : i32 to index
    %c18 = arith.constant 18 : index
    %112 = vector.load %arg2[%c0_40, %111, %c18] : memref<1x24x384xf32, #tpu.memory_space<vmem>>, vector<1x16x256xf32>
    %113 = vector.shape_cast %112 : vector<1x16x256xf32> to vector<16x256xf32>
    %c112 = arith.constant 112 : index
    %c0_41 = arith.constant 0 : index
    %114 = vector.load %arg6[%c112, %c0_41] : memref<408x256xf32, #tpu.memory_space<vmem>>, vector<16x256xf32>
    tpu.vector_store %arg6[%c112, %c0_41], %113 {strides = array<i32>} : memref<408x256xf32, #tpu.memory_space<vmem>>, vector<16x256xf32>,
    %c0_42 = arith.constant 0 : index
    %115 = arith.index_cast %1 : i32 to index
    %c19 = arith.constant 19 : index
    %116 = vector.load %arg2[%c0_42, %115, %c19] : memref<1x24x384xf32, #tpu.memory_space<vmem>>, vector<1x16x256xf32>
    %117 = vector.shape_cast %116 : vector<1x16x256xf32> to vector<16x256xf32>
    %cst_43 = arith.constant 0.000000e+00 : f32
    %118 = vector.shape_cast %45 : vector<1x256xi1> to vector<1x256xi1>
    %119 = vector.broadcast %118 : vector<1x256xi1> to vector<16x256xi1>
    %120 = vector.broadcast %cst_43 : f32 to vector<16x256xf32>
    %121 = arith.select %119, %117, %120 : vector<16x256xi1>, vector<16x256xf32>
    %c128 = arith.constant 128 : index
    %c0_44 = arith.constant 0 : index
    %122 = vector.load %arg6[%c128, %c0_44] : memref<408x256xf32, #tpu.memory_space<vmem>>, vector<16x256xf32>
    tpu.vector_store %arg6[%c128, %c0_44], %121 {strides = array<i32>} : memref<408x256xf32, #tpu.memory_space<vmem>>, vector<16x256xf32>,
    %c0_45 = arith.constant 0 : index
    %123 = arith.index_cast %1 : i32 to index
    %c20 = arith.constant 20 : index
    %124 = vector.load %arg2[%c0_45, %123, %c20] : memref<1x24x384xf32, #tpu.memory_space<vmem>>, vector<1x16x256xf32>
    %125 = vector.shape_cast %124 : vector<1x16x256xf32> to vector<16x256xf32>
    %cst_46 = arith.constant 0.000000e+00 : f32
    %126 = vector.shape_cast %54 : vector<1x256xi1> to vector<1x256xi1>
    %127 = vector.broadcast %126 : vector<1x256xi1> to vector<16x256xi1>
    %128 = vector.broadcast %cst_46 : f32 to vector<16x256xf32>
    %129 = arith.select %127, %125, %128 : vector<16x256xi1>, vector<16x256xf32>
    %c144 = arith.constant 144 : index
    %c0_47 = arith.constant 0 : index
    %130 = vector.load %arg6[%c144, %c0_47] : memref<408x256xf32, #tpu.memory_space<vmem>>, vector<16x256xf32>
    tpu.vector_store %arg6[%c144, %c0_47], %129 {strides = array<i32>} : memref<408x256xf32, #tpu.memory_space<vmem>>, vector<16x256xf32>,
    %c0_48 = arith.constant 0 : index
    %131 = arith.index_cast %1 : i32 to index
    %c32_49 = arith.constant 32 : index
    %132 = vector.load %arg2[%c0_48, %131, %c32_49] : memref<1x24x384xf32, #tpu.memory_space<vmem>>, vector<1x16x256xf32>
    %133 = vector.shape_cast %132 : vector<1x16x256xf32> to vector<16x256xf32>
    %cst_50 = arith.constant 0.000000e+00 : f32
    %134 = vector.shape_cast %27 : vector<1x256xi1> to vector<1x256xi1>
    %135 = vector.broadcast %134 : vector<1x256xi1> to vector<16x256xi1>
    %136 = vector.broadcast %cst_50 : f32 to vector<16x256xf32>
    %137 = arith.select %135, %133, %136 : vector<16x256xi1>, vector<16x256xf32>
    %c160 = arith.constant 160 : index
    %c0_51 = arith.constant 0 : index
    %138 = vector.load %arg6[%c160, %c0_51] : memref<408x256xf32, #tpu.memory_space<vmem>>, vector<16x256xf32>
    tpu.vector_store %arg6[%c160, %c0_51], %137 {strides = array<i32>} : memref<408x256xf32, #tpu.memory_space<vmem>>, vector<16x256xf32>,
    %c0_52 = arith.constant 0 : index
    %139 = arith.index_cast %1 : i32 to index
    %c33 = arith.constant 33 : index
    %140 = vector.load %arg2[%c0_52, %139, %c33] : memref<1x24x384xf32, #tpu.memory_space<vmem>>, vector<1x16x256xf32>
    %141 = vector.shape_cast %140 : vector<1x16x256xf32> to vector<16x256xf32>
    %cst_53 = arith.constant 0.000000e+00 : f32
    %142 = vector.shape_cast %36 : vector<1x256xi1> to vector<1x256xi1>
    %143 = vector.broadcast %142 : vector<1x256xi1> to vector<16x256xi1>
    %144 = vector.broadcast %cst_53 : f32 to vector<16x256xf32>
    %145 = arith.select %143, %141, %144 : vector<16x256xi1>, vector<16x256xf32>
    %c176 = arith.constant 176 : index
    %c0_54 = arith.constant 0 : index
    %146 = vector.load %arg6[%c176, %c0_54] : memref<408x256xf32, #tpu.memory_space<vmem>>, vector<16x256xf32>
    tpu.vector_store %arg6[%c176, %c0_54], %145 {strides = array<i32>} : memref<408x256xf32, #tpu.memory_space<vmem>>, vector<16x256xf32>,
    %c0_55 = arith.constant 0 : index
    %147 = arith.index_cast %1 : i32 to index
    %c34 = arith.constant 34 : index
    %148 = vector.load %arg2[%c0_55, %147, %c34] : memref<1x24x384xf32, #tpu.memory_space<vmem>>, vector<1x16x256xf32>
    %149 = vector.shape_cast %148 : vector<1x16x256xf32> to vector<16x256xf32>
    %c192 = arith.constant 192 : index
    %c0_56 = arith.constant 0 : index
    %150 = vector.load %arg6[%c192, %c0_56] : memref<408x256xf32, #tpu.memory_space<vmem>>, vector<16x256xf32>
    tpu.vector_store %arg6[%c192, %c0_56], %149 {strides = array<i32>} : memref<408x256xf32, #tpu.memory_space<vmem>>, vector<16x256xf32>,
    %c0_57 = arith.constant 0 : index
    %151 = arith.index_cast %1 : i32 to index
    %c35 = arith.constant 35 : index
    %152 = vector.load %arg2[%c0_57, %151, %c35] : memref<1x24x384xf32, #tpu.memory_space<vmem>>, vector<1x16x256xf32>
    %153 = vector.shape_cast %152 : vector<1x16x256xf32> to vector<16x256xf32>
    %cst_58 = arith.constant 0.000000e+00 : f32
    %154 = vector.shape_cast %45 : vector<1x256xi1> to vector<1x256xi1>
    %155 = vector.broadcast %154 : vector<1x256xi1> to vector<16x256xi1>
    %156 = vector.broadcast %cst_58 : f32 to vector<16x256xf32>
    %157 = arith.select %155, %153, %156 : vector<16x256xi1>, vector<16x256xf32>
    %c208 = arith.constant 208 : index
    %c0_59 = arith.constant 0 : index
    %158 = vector.load %arg6[%c208, %c0_59] : memref<408x256xf32, #tpu.memory_space<vmem>>, vector<16x256xf32>
    tpu.vector_store %arg6[%c208, %c0_59], %157 {strides = array<i32>} : memref<408x256xf32, #tpu.memory_space<vmem>>, vector<16x256xf32>,
    %c0_60 = arith.constant 0 : index
    %159 = arith.index_cast %1 : i32 to index
    %c36 = arith.constant 36 : index
    %160 = vector.load %arg2[%c0_60, %159, %c36] : memref<1x24x384xf32, #tpu.memory_space<vmem>>, vector<1x16x256xf32>
    %161 = vector.shape_cast %160 : vector<1x16x256xf32> to vector<16x256xf32>
    %cst_61 = arith.constant 0.000000e+00 : f32
    %162 = vector.shape_cast %54 : vector<1x256xi1> to vector<1x256xi1>
    %163 = vector.broadcast %162 : vector<1x256xi1> to vector<16x256xi1>
    %164 = vector.broadcast %cst_61 : f32 to vector<16x256xf32>
    %165 = arith.select %163, %161, %164 : vector<16x256xi1>, vector<16x256xf32>
    %c224 = arith.constant 224 : index
    %c0_62 = arith.constant 0 : index
    %166 = vector.load %arg6[%c224, %c0_62] : memref<408x256xf32, #tpu.memory_space<vmem>>, vector<16x256xf32>
    tpu.vector_store %arg6[%c224, %c0_62], %165 {strides = array<i32>} : memref<408x256xf32, #tpu.memory_space<vmem>>, vector<16x256xf32>,
    %c0_63 = arith.constant 0 : index
    %167 = arith.index_cast %1 : i32 to index
    %c48_64 = arith.constant 48 : index
    %168 = vector.load %arg2[%c0_63, %167, %c48_64] : memref<1x24x384xf32, #tpu.memory_space<vmem>>, vector<1x16x256xf32>
    %169 = vector.shape_cast %168 : vector<1x16x256xf32> to vector<16x256xf32>
    %cst_65 = arith.constant 0.000000e+00 : f32
    %170 = vector.shape_cast %27 : vector<1x256xi1> to vector<1x256xi1>
    %171 = vector.broadcast %170 : vector<1x256xi1> to vector<16x256xi1>
    %172 = vector.broadcast %cst_65 : f32 to vector<16x256xf32>
    %173 = arith.select %171, %169, %172 : vector<16x256xi1>, vector<16x256xf32>
    %c240 = arith.constant 240 : index
    %c0_66 = arith.constant 0 : index
    %174 = vector.load %arg6[%c240, %c0_66] : memref<408x256xf32, #tpu.memory_space<vmem>>, vector<16x256xf32>
    tpu.vector_store %arg6[%c240, %c0_66], %173 {strides = array<i32>} : memref<408x256xf32, #tpu.memory_space<vmem>>, vector<16x256xf32>,
    %c0_67 = arith.constant 0 : index
    %175 = arith.index_cast %1 : i32 to index
    %c49 = arith.constant 49 : index
    %176 = vector.load %arg2[%c0_67, %175, %c49] : memref<1x24x384xf32, #tpu.memory_space<vmem>>, vector<1x16x256xf32>
    %177 = vector.shape_cast %176 : vector<1x16x256xf32> to vector<16x256xf32>
    %cst_68 = arith.constant 0.000000e+00 : f32
    %178 = vector.shape_cast %36 : vector<1x256xi1> to vector<1x256xi1>
    %179 = vector.broadcast %178 : vector<1x256xi1> to vector<16x256xi1>
    %180 = vector.broadcast %cst_68 : f32 to vector<16x256xf32>
    %181 = arith.select %179, %177, %180 : vector<16x256xi1>, vector<16x256xf32>
    %c256 = arith.constant 256 : index
    %c0_69 = arith.constant 0 : index
    %182 = vector.load %arg6[%c256, %c0_69] : memref<408x256xf32, #tpu.memory_space<vmem>>, vector<16x256xf32>
    tpu.vector_store %arg6[%c256, %c0_69], %181 {strides = array<i32>} : memref<408x256xf32, #tpu.memory_space<vmem>>, vector<16x256xf32>,
    %c0_70 = arith.constant 0 : index
    %183 = arith.index_cast %1 : i32 to index
    %c50 = arith.constant 50 : index
    %184 = vector.load %arg2[%c0_70, %183, %c50] : memref<1x24x384xf32, #tpu.memory_space<vmem>>, vector<1x16x256xf32>
    %185 = vector.shape_cast %184 : vector<1x16x256xf32> to vector<16x256xf32>
    %c272 = arith.constant 272 : index
    %c0_71 = arith.constant 0 : index
    %186 = vector.load %arg6[%c272, %c0_71] : memref<408x256xf32, #tpu.memory_space<vmem>>, vector<16x256xf32>
    tpu.vector_store %arg6[%c272, %c0_71], %185 {strides = array<i32>} : memref<408x256xf32, #tpu.memory_space<vmem>>, vector<16x256xf32>,
    %c0_72 = arith.constant 0 : index
    %187 = arith.index_cast %1 : i32 to index
    %c51 = arith.constant 51 : index
    %188 = vector.load %arg2[%c0_72, %187, %c51] : memref<1x24x384xf32, #tpu.memory_space<vmem>>, vector<1x16x256xf32>
    %189 = vector.shape_cast %188 : vector<1x16x256xf32> to vector<16x256xf32>
    %cst_73 = arith.constant 0.000000e+00 : f32
    %190 = vector.shape_cast %45 : vector<1x256xi1> to vector<1x256xi1>
    %191 = vector.broadcast %190 : vector<1x256xi1> to vector<16x256xi1>
    %192 = vector.broadcast %cst_73 : f32 to vector<16x256xf32>
    %193 = arith.select %191, %189, %192 : vector<16x256xi1>, vector<16x256xf32>
    %c288 = arith.constant 288 : index
    %c0_74 = arith.constant 0 : index
    %194 = vector.load %arg6[%c288, %c0_74] : memref<408x256xf32, #tpu.memory_space<vmem>>, vector<16x256xf32>
    tpu.vector_store %arg6[%c288, %c0_74], %193 {strides = array<i32>} : memref<408x256xf32, #tpu.memory_space<vmem>>, vector<16x256xf32>,
    %c0_75 = arith.constant 0 : index
    %195 = arith.index_cast %1 : i32 to index
    %c52 = arith.constant 52 : index
    %196 = vector.load %arg2[%c0_75, %195, %c52] : memref<1x24x384xf32, #tpu.memory_space<vmem>>, vector<1x16x256xf32>
    %197 = vector.shape_cast %196 : vector<1x16x256xf32> to vector<16x256xf32>
    %cst_76 = arith.constant 0.000000e+00 : f32
    %198 = vector.shape_cast %54 : vector<1x256xi1> to vector<1x256xi1>
    %199 = vector.broadcast %198 : vector<1x256xi1> to vector<16x256xi1>
    %200 = vector.broadcast %cst_76 : f32 to vector<16x256xf32>
    %201 = arith.select %199, %197, %200 : vector<16x256xi1>, vector<16x256xf32>
    %c304 = arith.constant 304 : index
    %c0_77 = arith.constant 0 : index
    %202 = vector.load %arg6[%c304, %c0_77] : memref<408x256xf32, #tpu.memory_space<vmem>>, vector<16x256xf32>
    tpu.vector_store %arg6[%c304, %c0_77], %201 {strides = array<i32>} : memref<408x256xf32, #tpu.memory_space<vmem>>, vector<16x256xf32>,
    %c0_78 = arith.constant 0 : index
    %203 = arith.index_cast %1 : i32 to index
    %c64_79 = arith.constant 64 : index
    %204 = vector.load %arg2[%c0_78, %203, %c64_79] : memref<1x24x384xf32, #tpu.memory_space<vmem>>, vector<1x16x256xf32>
    %205 = vector.shape_cast %204 : vector<1x16x256xf32> to vector<16x256xf32>
    %cst_80 = arith.constant 0.000000e+00 : f32
    %206 = vector.shape_cast %27 : vector<1x256xi1> to vector<1x256xi1>
    %207 = vector.broadcast %206 : vector<1x256xi1> to vector<16x256xi1>
    %208 = vector.broadcast %cst_80 : f32 to vector<16x256xf32>
    %209 = arith.select %207, %205, %208 : vector<16x256xi1>, vector<16x256xf32>
    %c320 = arith.constant 320 : index
    %c0_81 = arith.constant 0 : index
    %210 = vector.load %arg6[%c320, %c0_81] : memref<408x256xf32, #tpu.memory_space<vmem>>, vector<16x256xf32>
    tpu.vector_store %arg6[%c320, %c0_81], %209 {strides = array<i32>} : memref<408x256xf32, #tpu.memory_space<vmem>>, vector<16x256xf32>,
    %c0_82 = arith.constant 0 : index
    %211 = arith.index_cast %1 : i32 to index
    %c65 = arith.constant 65 : index
    %212 = vector.load %arg2[%c0_82, %211, %c65] : memref<1x24x384xf32, #tpu.memory_space<vmem>>, vector<1x16x256xf32>
    %213 = vector.shape_cast %212 : vector<1x16x256xf32> to vector<16x256xf32>
    %cst_83 = arith.constant 0.000000e+00 : f32
    %214 = vector.shape_cast %36 : vector<1x256xi1> to vector<1x256xi1>
    %215 = vector.broadcast %214 : vector<1x256xi1> to vector<16x256xi1>
    %216 = vector.broadcast %cst_83 : f32 to vector<16x256xf32>
    %217 = arith.select %215, %213, %216 : vector<16x256xi1>, vector<16x256xf32>
    %c336 = arith.constant 336 : index
    %c0_84 = arith.constant 0 : index
    %218 = vector.load %arg6[%c336, %c0_84] : memref<408x256xf32, #tpu.memory_space<vmem>>, vector<16x256xf32>
    tpu.vector_store %arg6[%c336, %c0_84], %217 {strides = array<i32>} : memref<408x256xf32, #tpu.memory_space<vmem>>, vector<16x256xf32>,
    %c0_85 = arith.constant 0 : index
    %219 = arith.index_cast %1 : i32 to index
    %c66 = arith.constant 66 : index
    %220 = vector.load %arg2[%c0_85, %219, %c66] : memref<1x24x384xf32, #tpu.memory_space<vmem>>, vector<1x16x256xf32>
    %221 = vector.shape_cast %220 : vector<1x16x256xf32> to vector<16x256xf32>
    %c352 = arith.constant 352 : index
    %c0_86 = arith.constant 0 : index
    %222 = vector.load %arg6[%c352, %c0_86] : memref<408x256xf32, #tpu.memory_space<vmem>>, vector<16x256xf32>
    tpu.vector_store %arg6[%c352, %c0_86], %221 {strides = array<i32>} : memref<408x256xf32, #tpu.memory_space<vmem>>, vector<16x256xf32>,
    %c0_87 = arith.constant 0 : index
    %223 = arith.index_cast %1 : i32 to index
    %c67 = arith.constant 67 : index
    %224 = vector.load %arg2[%c0_87, %223, %c67] : memref<1x24x384xf32, #tpu.memory_space<vmem>>, vector<1x16x256xf32>
    %225 = vector.shape_cast %224 : vector<1x16x256xf32> to vector<16x256xf32>
    %cst_88 = arith.constant 0.000000e+00 : f32
    %226 = vector.shape_cast %45 : vector<1x256xi1> to vector<1x256xi1>
    %227 = vector.broadcast %226 : vector<1x256xi1> to vector<16x256xi1>
    %228 = vector.broadcast %cst_88 : f32 to vector<16x256xf32>
    %229 = arith.select %227, %225, %228 : vector<16x256xi1>, vector<16x256xf32>
    %c368 = arith.constant 368 : index
    %c0_89 = arith.constant 0 : index
    %230 = vector.load %arg6[%c368, %c0_89] : memref<408x256xf32, #tpu.memory_space<vmem>>, vector<16x256xf32>
    tpu.vector_store %arg6[%c368, %c0_89], %229 {strides = array<i32>} : memref<408x256xf32, #tpu.memory_space<vmem>>, vector<16x256xf32>,
    %c0_90 = arith.constant 0 : index
    %231 = arith.index_cast %1 : i32 to index
    %c68 = arith.constant 68 : index
    %232 = vector.load %arg2[%c0_90, %231, %c68] : memref<1x24x384xf32, #tpu.memory_space<vmem>>, vector<1x16x256xf32>
    %233 = vector.shape_cast %232 : vector<1x16x256xf32> to vector<16x256xf32>
    %cst_91 = arith.constant 0.000000e+00 : f32
    %234 = vector.shape_cast %54 : vector<1x256xi1> to vector<1x256xi1>
    %235 = vector.broadcast %234 : vector<1x256xi1> to vector<16x256xi1>
    %236 = vector.broadcast %cst_91 : f32 to vector<16x256xf32>
    %237 = arith.select %235, %233, %236 : vector<16x256xi1>, vector<16x256xf32>
    %c384 = arith.constant 384 : index
    %c0_92 = arith.constant 0 : index
    %238 = vector.load %arg6[%c384, %c0_92] : memref<408x256xf32, #tpu.memory_space<vmem>>, vector<16x256xf32>
    tpu.vector_store %arg6[%c384, %c0_92], %237 {strides = array<i32>} : memref<408x256xf32, #tpu.memory_space<vmem>>, vector<16x256xf32>,
    %c0_93 = arith.constant 0 : index
    %c0_94 = arith.constant 0 : index
    %239 = vector.load %arg3[%c0_93, %c0_94] : memref<128x408xf32, #tpu.memory_space<vmem>>, vector<128x408xf32>
    %c0_95 = arith.constant 0 : index
    %c0_96 = arith.constant 0 : index
    %240 = vector.load %arg6[%c0_95, %c0_96] : memref<408x256xf32, #tpu.memory_space<vmem>>, vector<408x256xf32>
    %cst_97 = arith.constant dense<0.000000e+00> : vector<128x256xf32>
    %241 = tpu.matmul %239, %240, %cst_97 {dimension_numbers = #tpu.dot_dimension_numbers<[1], [0], [0], [1], [0, 0, 1, 1], [], []>} : vector<128x408xf32>, vector<408x256xf32>, vector<128x256xf32> -> vector<128x256xf32>
    %242 = vector.shape_cast %241 : vector<128x256xf32> to vector<1x8x16x256xf32>
    %c0_98 = arith.constant 0 : index
    %c0_99 = arith.constant 0 : index
    %c0_100 = arith.constant 0 : index
    %c0_101 = arith.constant 0 : index
    %243 = vector.load %arg4[%c0_98, %c0_99, %c0_100, %c0_101] : memref<1x8x16x256xf32, #tpu.memory_space<vmem>>, vector<1x8x16x256xf32>
    tpu.vector_store %arg4[%c0_98, %c0_99, %c0_100, %c0_101], %242 {strides = array<i32>} : memref<1x8x16x256xf32, #tpu.memory_space<vmem>>, vector<1x8x16x256xf32>,
    %cst_102 = arith.constant dense<0.000000e+00> : vector<128xf32>
    %244 = vector.multi_reduction <add>, %241, %cst_102 [1] : vector<128x256xf32> to vector<128xf32>
    %245 = vector.shape_cast %244 : vector<128xf32> to vector<128x1xf32>
    %246 = arith.mulf %241, %241 : vector<128x256xf32>
    %cst_103 = arith.constant dense<0.000000e+00> : vector<128xf32>
    %247 = vector.multi_reduction <add>, %246, %cst_103 [1] : vector<128x256xf32> to vector<128xf32>
    %248 = vector.shape_cast %247 : vector<128xf32> to vector<128x1xf32>
    %249 = tpu.concatenate %245, %248 in 1 : vector<128x1xf32>, vector<128x1xf32> -> vector<128x2xf32>
    %c0_104 = arith.constant 0 : index
    %c0_105 = arith.constant 0 : index
    %c0_106 = arith.constant 0 : index
    %c0_107 = arith.constant 0 : index
    %250 = vector.load %arg5[%c0_104, %c0_105, %c0_106, %c0_107] : memref<1x1x128x2xf32, #tpu.memory_space<vmem>>, vector<1x1x128x2xf32>
    %251 = vector.shape_cast %250 : vector<1x1x128x2xf32> to vector<128x2xf32>
    %252 = vector.shape_cast %249 : vector<128x2xf32> to vector<1x1x128x2xf32>
    tpu.vector_store %arg5[%c0_104, %c0_105, %c0_106, %c0_107], %252 {strides = array<i32>} : memref<1x1x128x2xf32, #tpu.memory_space<vmem>>, vector<1x1x128x2xf32>,
    return
  }
  func.func @transform_0(%arg0: i32, %arg1: i32) -> (i32, i32, i32) {
    %c0_i32 = arith.constant 0 : i32
    %c0_i32_0 = arith.constant 0 : i32
    %c0_i32_1 = arith.constant 0 : i32
    return %arg0, %c0_i32, %c0_i32_0 : i32, i32, i32
  }
  func.func @transform_1(%arg0: i32, %arg1: i32) -> (i32, i32) {
    %c0_i32 = arith.constant 0 : i32
    %c0_i32_0 = arith.constant 0 : i32
    %c0_i32_1 = arith.constant 0 : i32
    return %c0_i32, %c0_i32_0 : i32, i32
  }
  func.func @transform_2(%arg0: i32, %arg1: i32) -> (i32, i32, i32, i32) {
    %c0_i32 = arith.constant 0 : i32
    %c0_i32_0 = arith.constant 0 : i32
    %c0_i32_1 = arith.constant 0 : i32
    return %arg0, %arg1, %c0_i32, %c0_i32_0 : i32, i32, i32, i32
  }
  func.func @transform_3(%arg0: i32, %arg1: i32) -> (i32, i32, i32, i32) {
    %c0_i32 = arith.constant 0 : i32
    %c0_i32_0 = arith.constant 0 : i32
    %c0_i32_1 = arith.constant 0 : i32
    return %arg0, %arg1, %c0_i32, %c0_i32_0 : i32, i32, i32, i32
  }
}

</mosaic_0001>

<llo_original>
// kernel: tpu_custom_call.1
$region0: #{tpu_custom_call.1}
  #allocation0 [shape = 'u32[]', space=smem, size = 0x4, offset = 0x4, fixed_abs, tag = 'smem constant byte address 0x4 - core index']
  #allocation1 [shape = 'u32[144,128]{1,0:T(1,128)}', space=vmem, size = 0x12000, scoped, tag = 'internal scratch']
  #allocation2 [shape = 'f32[408,256]{1,0:T(8,128)}', space=vmem, size = 0x66000, scoped, tag = 'scratch operand']
  %s0 = inlined_call_operand.vmem [shape: f32[2,24,384], index: 0, kind: input, shape index: {}]
  %s1 = inlined_call_operand.vmem [shape: f32[128,408], index: 1, kind: input, shape index: {}]
  %s2 = inlined_call_operand.hbm [shape: f32[2,16,16,256], index: 2, kind: output, shape index: {0}]
  %s3 = inlined_call_operand.vmem [shape: f32[2,2,128,2], index: 3, kind: output, shape index: {1}]
  %4 = xla_tuple %s2, %s3
  %s5 = sld [smem:[#allocation0]]
  $region49: #{tpu_custom_call.1} parent=0
    _
  %s7 = ssub.s32 1, %s5
  %s8 = scalar_select 0, %s7, %s5
  $region1: #{tpu_custom_call.1} parent=0
    #allocation3 [shape = 'u8[262144]{0}', space=vmem, size = 0x40000, scoped, tag = 'output window, operand 0']
    #allocation4 [shape = 's32[2]{0}', space=sflag, size = 0x8, scoped, tag = 'scoped memory for tpu_custom_call.1']
    %9 = vsyncpa [#allocation4], 0
    %s10 = scalar_lea.sflag [#allocation4], 1
    %11 = vsyncpa %s10, 0
    loop: start=0, step=1, limit=6
    $region2: #{tpu_custom_call.1} parent=1 // loop_pre_header
      _
    $region3: #{tpu_custom_call.1} parent=1 // loop_header
      %s13 = sphi 0, %s17
      %p14 = scmp.ge.s32.totalorder %s13, 6
      %s20 = sphi 0, %s32
      %s21 = sphi 0, %s28
      %s22 = sphi 0, %s20
      %s23 = sphi 0, %s21
      %s24 = sphi 0, %s22
      %s25 = sphi 0, %s23
      %s35 = sphi 0, %s37
      %s38 = sphi 0, %s35
      %s39 = sphi 0, %s38
      %s55 = sphi 0, %s39
      %s59 = sphi 0, %s59
      %s61 = sphi 0, %s59
      %s62 = sphi 0, %s61
      %s76 = sphi 0, %s62
      %s84 = sphi 0, %s86
      %s87 = sphi 0, %s84
      %s88 = sphi 0, %s87
      %s104 = sphi 0, %s88
      %s112 = sphi 0, %s114
      %s115 = sphi 0, %s112
      %s116 = sphi 0, %s115
      %s132 = sphi 0, %s116
    $region4: #{tpu_custom_call.1} parent=1 // loop_header_branch
      %16 = sbr.rel (%p14) target = $region8
    $region5: #{tpu_custom_call.1} parent=1 // loop_body
      %s18 = ssub.s32 %s13, 1
      %s19 = ssub.s32 %s13, 2
      %s26 = sadd.s32 1, %s21
      %p27 = scmp.ge.s32.totalorder %s26, 2
      %s28 = scalar_select %p27, 0, %s26
      %s29 = sadd.s32 1, %s20
      %s30 = scalar_select %p27, %s29, %s20
      %p31 = scmp.ge.s32.totalorder %s30, 2
      %s32 = scalar_select %p31, 0, %s30
      %s33 = ssub.s32 %s20, %s32
      %p34 = scmp.eq.s32.totalorder %s33, 0
      %s36 = sadd.s32 %s35, 1
      %s37 = scalar_select %p34, %s35, %s36
      %p40 = pneg %p34
      %p41 = scmp.eq.s32.totalorder %s13, 3
      %p42 = por %p40, %p41
      %p43 = scmp.ne.s32.totalorder %s35, %s38
      %p44 = scmp.eq.s32.totalorder %s13, 0
      %p45 = por %p43, %p44
      %p46 = scmp.ne.s32.totalorder %s35, %s38
      %p47 = scmp.eq.s32.totalorder %s18, 3
      %p48 = por %p46, %p47
      %p49 = scmp.ne.s32.totalorder %s38, %s39
      %p50 = scmp.eq.s32.totalorder %s18, 0
      %p51 = por %p49, %p50
      %p52 = scmp.ne.s32.totalorder %s38, %s39
      %p53 = scmp.eq.s32.totalorder %s19, 3
      %p54 = por %p52, %p53
      %p56 = scmp.ne.s32.totalorder %s39, %s55
      %p57 = scmp.eq.s32.totalorder %s19, 0
      %p58 = por %p56, %p57
      %s60 = sadd.s32 %s59, 1
      %p63 = scmp.eq.s32.totalorder %s13, 3
      %p64 = scmp.ne.s32.totalorder %s59, %s61
      %p65 = scmp.eq.s32.totalorder %s13, 0
      %p66 = por %p64, %p65
      %p67 = scmp.ne.s32.totalorder %s59, %s61
      %p68 = scmp.eq.s32.totalorder %s18, 3
      %p69 = por %p67, %p68
      %p70 = scmp.ne.s32.totalorder %s61, %s62
      %p71 = scmp.eq.s32.totalorder %s18, 0
      %p72 = por %p70, %p71
      %p73 = scmp.ne.s32.totalorder %s61, %s62
      %p74 = scmp.eq.s32.totalorder %s19, 3
      %p75 = por %p73, %p74
      %p77 = scmp.ne.s32.totalorder %s62, %s76
      %p78 = scmp.eq.s32.totalorder %s19, 0
      %p79 = por %p77, %p78
      %s80 = ssub.s32 %s20, %s32
      %s81 = ssub.s32 %s21, %s28
      %s82 = sor.u32 %s80, %s81
      %p83 = scmp.eq.s32.totalorder %s82, 0
      %s85 = sadd.s32 %s84, 1
      %s86 = scalar_select %p83, %s84, %s85
      %p89 = pneg %p83
      %p90 = scmp.eq.s32.totalorder %s13, 3
      %p91 = por %p89, %p90
      %p92 = scmp.ne.s32.totalorder %s84, %s87
      %p93 = scmp.eq.s32.totalorder %s13, 0
      %p94 = por %p92, %p93
      %p95 = scmp.ne.s32.totalorder %s84, %s87
      %p96 = scmp.eq.s32.totalorder %s18, 3
      %p97 = por %p95, %p96
      %p98 = scmp.ne.s32.totalorder %s87, %s88
      %p99 = scmp.eq.s32.totalorder %s18, 0
      %p100 = por %p98, %p99
      %p101 = scmp.ne.s32.totalorder %s87, %s88
      %p102 = scmp.eq.s32.totalorder %s19, 3
      %p103 = por %p101, %p102
      %p105 = scmp.ne.s32.totalorder %s88, %s104
      %p106 = scmp.eq.s32.totalorder %s19, 0
      %p107 = por %p105, %p106
      %s108 = ssub.s32 %s20, %s32
      %s109 = ssub.s32 %s21, %s28
      %s110 = sor.u32 %s108, %s109
      %p111 = scmp.eq.s32.totalorder %s110, 0
      %s113 = sadd.s32 %s112, 1
      %s114 = scalar_select %p111, %s112, %s113
      %p117 = pneg %p111
      %p118 = scmp.eq.s32.totalorder %s13, 3
      %p119 = por %p117, %p118
      %p120 = scmp.ne.s32.totalorder %s112, %s115
      %p121 = scmp.eq.s32.totalorder %s13, 0
      %p122 = por %p120, %p121
      %p123 = scmp.ne.s32.totalorder %s112, %s115
      %p124 = scmp.eq.s32.totalorder %s18, 3
      %p125 = por %p123, %p124
      %p126 = scmp.ne.s32.totalorder %s115, %s116
      %p127 = scmp.eq.s32.totalorder %s18, 0
      %p128 = por %p126, %p127
      %p129 = scmp.ne.s32.totalorder %s115, %s116
      %p130 = scmp.eq.s32.totalorder %s19, 3
      %p131 = por %p129, %p130
      %p133 = scmp.ne.s32.totalorder %s116, %s132
      %p134 = scmp.eq.s32.totalorder %s19, 0
      %p135 = por %p133, %p134
      %p136 = scmp.le.s32.totalorder 1, %s13
      %p137 = scmp.lt.s32.totalorder %s13, 5
      %p138 = pnand %p136, %p137
      %p139 = pneg %p138
      // Predicated region
      $region9: #{tpu_custom_call.1} parent=5 // pred_check
        _
      $region10: #{tpu_custom_call.1} parent=5 // pred_check_branch
        %141 = sbr.rel (%p138) target = $region12
      $region11: #{tpu_custom_call.1} parent=5 // pred_region
        %s142 = ssub.s32 %s13, 1
        // Predicated region
        $region13: #{tpu_custom_call.1} parent=11 // pred_check
          %p143 = pneg %p72
        $region14: #{tpu_custom_call.1} parent=11 // pred_check_branch
          %145 = sbr.rel (%p143) target = $region16
        $region15: #{tpu_custom_call.1} parent=11 // pred_region
          _
        $region16: #{tpu_custom_call.1} parent=11 // pred_fallthru
          _
      $region12: #{tpu_custom_call.1} parent=5 // pred_fallthru
        _
      %p146 = scmp.lt.s32.totalorder %s13, 4
      // Predicated region
      $region17: #{tpu_custom_call.1} parent=5 // pred_check
        %p147 = pneg %p146
      $region18: #{tpu_custom_call.1} parent=5 // pred_check_branch
        %149 = sbr.rel (%p147) target = $region20
      $region19: #{tpu_custom_call.1} parent=5 // pred_region
        // Predicated region
        $region21: #{tpu_custom_call.1} parent=19 // pred_check
          %p150 = pneg %p45
        $region22: #{tpu_custom_call.1} parent=19 // pred_check_branch
          %152 = sbr.rel (%p150) target = $region24
        $region23: #{tpu_custom_call.1} parent=19 // pred_region
          %p153 = scmp.lt.s32.totalorder %s20, 1
          %s154 = scalar_select %p153, %s20, 1
          %s155 = smul.addr %s154, 9
          %s156 = smul.addr %s155, 8
          %s157 = scalar_lea.vmem %s0, %s156
        $region24: #{tpu_custom_call.1} parent=19 // pred_fallthru
          _
      $region20: #{tpu_custom_call.1} parent=5 // pred_fallthru
        _
      %p158 = scmp.le.s32.totalorder 1, %s13
      %p159 = scmp.lt.s32.totalorder %s13, 5
      %p160 = pnand %p158, %p159
      %p161 = pneg %p160
      // Predicated region
      $region25: #{tpu_custom_call.1} parent=5 // pred_check
        _
      $region26: #{tpu_custom_call.1} parent=5 // pred_check_branch
        %163 = sbr.rel (%p160) target = $region28
      $region27: #{tpu_custom_call.1} parent=5 // pred_region
        %s164 = ssub.s32 %s13, 1
        %p165 = scmp.lt.s32.totalorder %s22, 1
        %s166 = scalar_select %p165, %s22, 1
        %s167 = smul.addr %s166, 9
        %s168 = smul.addr %s167, 8
        %s169 = scalar_lea.vmem %s0, %s168
        %p170 = pneg %p51
        %p171 = pneg %p48
        %p172 = pneg %p72
        %p173 = pneg %p69
        %p174 = pneg %p100
        %p175 = pneg %p97
        %s176 = sand.u32 %s87, 1
        %s177 = scalar_lea.sflag [#allocation4], %s176
        %s178 = sand.u32 %s87, 1
        %s179 = smul.addr %s178, 256
        %s180 = scalar_lea.vmem [#allocation3], %s179
        %p181 = pneg %p128
        %p182 = pneg %p125
        %p183 = scmp.lt.s32.totalorder %s22, 1
        %s184 = scalar_select %p183, %s22, 1
        %p185 = scmp.lt.s32.totalorder %s23, 1
        %s186 = scalar_select %p185, %s23, 1
        %s187 = smul.addr %s186, 16
        %s188 = smul.addr %s184, 32
        %s189 = sadd.s32 %s187, %s188
        %s190 = smul.addr %s189, 8
        %s191 = scalar_lea.vmem %s3, %s190
        %p192 = scmp.lt.s32.totalorder %s22, 1
        %s193 = scalar_select %p192, %s22, 1
        %s194 = smul.addr %s193, 9
        %s195 = smul.addr %s194, 8
        %s196 = scalar_lea.vmem %s0, %s195
        %s197 = smul.u32 8, %s23
        %p198 = scmp.lt.s32.totalorder %s22, 1
        %s199 = scalar_select %p198, %s22, 1
        %p200 = scmp.lt.s32.totalorder %s23, 1
        %s201 = scalar_select %p200, %s23, 1
        %s202 = smul.addr %s201, 16
        %s203 = smul.addr %s199, 32
        %s204 = sadd.s32 %s202, %s203
        %s205 = smul.addr %s204, 8
        %s206 = scalar_lea.vmem %s3, %s205
        %s207 = smul.u32 %s23, 8
        %v208 = vlaneseq
        %v209 = vand.u32 %v208, 127
        %v210 = vadd.s32 %v209, 128
        %vm211 = vcmp.lt.s32.totalorder %v209, 0
        %v212 = vsub.s32 0, %v209
        %v213 = vsel %vm211, %v212, %v209
        %v214 = vshrl.u32 %v213, 4
        %v215 = vand.u32 %v213, 15
        %v216 = vsub.s32 0, %v215
        %v217 = vsel %vm211, %v216, %v215
        %vm218 = vcmp.lt.s32.totalorder %v210, 0
        %v219 = vsub.s32 0, %v210
        %v220 = vsel %vm218, %v219, %v210
        %v221 = vshrl.u32 %v220, 4
        %v222 = vand.u32 %v220, 15
        %v223 = vsub.s32 0, %v222
        %v224 = vsel %vm218, %v223, %v222
        %vm225 = vcmp.ne.s32.totalorder %v217, 0
        %vm226 = vcmp.ne.s32.totalorder %v224, 0
        %vm227 = vcmp.lt.s32.totalorder %v217, 0
        %vm228 = vcmp.lt.s32.totalorder %v224, 0
        %vm229 = vmand %vm227, %vm225
        %vm230 = vmand %vm228, %vm226
        %v231 = vadd.s32 %v217, 16
        %v232 = vadd.s32 %v224, 16
        %v233 = vsel %vm229, %v231, %v217
        %v234 = vsel %vm230, %v232, %v224
        %v235 = vadd.s32 %v233, 4294967294
        %v236 = vadd.s32 %v234, 4294967294
        %vm237 = vcmp.ge.s32.totalorder %v235, 0
        %vm238 = vcmp.ge.s32.totalorder %v236, 0
        %vm239 = vcmp.lt.s32.totalorder %v235, 16
        %vm240 = vcmp.lt.s32.totalorder %v236, 16
        %vm241 = vmand %vm237, %vm239
        %vm242 = vmand %vm238, %vm240
        %v243 = vadd.s32 %v233, 4294967295
        %v244 = vadd.s32 %v234, 4294967295
        %vm245 = vcmp.ge.s32.totalorder %v243, 0
        %vm246 = vcmp.ge.s32.totalorder %v244, 0
        %vm247 = vcmp.lt.s32.totalorder %v243, 16
        %vm248 = vcmp.lt.s32.totalorder %v244, 16
        %vm249 = vmand %vm245, %vm247
        %vm250 = vmand %vm246, %vm248
        %v251 = vadd.s32 %v233, 1
        %v252 = vadd.s32 %v234, 1
        %vm253 = vcmp.ge.s32.totalorder %v251, 0
        %vm254 = vcmp.ge.s32.totalorder %v252, 0
        %vm255 = vcmp.lt.s32.totalorder %v251, 16
        %vm256 = vcmp.lt.s32.totalorder %v252, 16
        %vm257 = vmand %vm253, %vm255
        %vm258 = vmand %vm254, %vm256
        %v259 = vadd.s32 %v233, 2
        %v260 = vadd.s32 %v234, 2
        %vm261 = vcmp.ge.s32.totalorder %v259, 0
        %vm262 = vcmp.ge.s32.totalorder %v260, 0
        %vm263 = vcmp.lt.s32.totalorder %v259, 16
        %vm264 = vcmp.lt.s32.totalorder %v260, 16
        %vm265 = vmand %vm261, %vm263
        %vm266 = vmand %vm262, %vm264
        %vm267 = vcmask 1040384
        %v268 = vsel %vm267, 1.0, 0.0
        %269 = vst [vmem:[#allocation2 + $0x320] sm:$0xff] %v268
        %270 = vst [vmem:[#allocation2 + $0x328] sm:$0xff] %v268
        %s271 = sshra.s32 %s207, 3
        %s272 = sand.u32 %s207, 7
        %s273 = smul.u32 %s271, 3
        %s274 = smul.addr %s273, 8
        %s275 = scalar_lea.vmem %s196, %s274
        %v276 = vld [vmem:[%s275] sm:$0xff]
        %v277 = vld [vmem:[%s275 + $0x8] sm:$0xff]
        %v278 = vld [vmem:[%s275 + $0x18] sm:$0xff]
        %v279 = vld [vmem:[%s275 + $0x20] sm:$0xff]
        %v280 = vsel %vm241, 1, 0
        %v281 = vsel %vm242, 1, 0
        %vm282 = vcmp.eq.s32.totalorder %v280, 1
        %vm283 = vcmp.eq.s32.totalorder %v281, 1
        %v284 = vsel %vm282, %v276, 0.0
        %v285 = vsel %vm283, %v277, 0.0
        %v286 = vsel %vm282, %v278, 0.0
        %v287 = vsel %vm283, %v279, 0.0
        %288 = vst [vmem:[#allocation2] sm:$0xff] %v284
        %289 = vst [vmem:[#allocation2 + $0x8] sm:$0xff] %v285
        %290 = vst [vmem:[#allocation2 + $0x10] sm:$0xff] %v286
        %291 = vst [vmem:[#allocation2 + $0x18] sm:$0xff] %v287
        %v292 = vld [vmem:[%s275] sm:$0xff]
        %v293 = vld [vmem:[%s275 + $0x8] sm:$0xff]
        %v294 = vld [vmem:[%s275 + $0x10] sm:$0xff]
        %v295 = vld [vmem:[%s275 + $0x18] sm:$0xff]
        %v296 = vld [vmem:[%s275 + $0x20] sm:$0xff]
        %v297 = vld [vmem:[%s275 + $0x28] sm:$0xff]
        %v298 = vsel %vm249, 1, 0
        %v299 = vsel %vm250, 1, 0
        %vm300 = vcmp.eq.s32.totalorder %v298, 1
        %vm301 = vcmp.eq.s32.totalorder %v299, 1
        %308 = vrot.lane.b32.xlu0 %v292, 127
        %v309 = vpop.permute.xlu0 %308
        %310 = vrot.lane.b32.xlu0 %v293, 127
        %v311 = vpop.permute.xlu0 %310
        %312 = vrot.lane.b32.xlu0 %v294, 127
        %v313 = vpop.permute.xlu0 %312
        %314 = vrot.lane.b32.xlu0 %v295, 127
        %v315 = vpop.permute.xlu0 %314
        %316 = vrot.lane.b32.xlu0 %v296, 127
        %v317 = vpop.permute.xlu0 %316
        %318 = vrot.lane.b32.xlu0 %v297, 127
        %v319 = vpop.permute.xlu0 %318
        %vm320 = vcmask 1039360
        %v321 = vsel %vm320, %v309, %v311
        %v322 = vsel %vm320, %v311, %v313
        %v323 = vsel %vm320, %v315, %v317
        %v324 = vsel %vm320, %v317, %v319
        %v329 = vsel %vm300, %v321, 0.0
        %v330 = vsel %vm301, %v322, 0.0
        %v331 = vsel %vm300, %v323, 0.0
        %v332 = vsel %vm301, %v324, 0.0
        %333 = vst [vmem:[#allocation2 + $0x20] sm:$0xff] %v329
        %334 = vst [vmem:[#allocation2 + $0x28] sm:$0xff] %v330
        %335 = vst [vmem:[#allocation2 + $0x30] sm:$0xff] %v331
        %336 = vst [vmem:[#allocation2 + $0x38] sm:$0xff] %v332
        %v337 = vld [vmem:[%s275] sm:$0xff]
        %v338 = vld [vmem:[%s275 + $0x8] sm:$0xff]
        %v339 = vld [vmem:[%s275 + $0x10] sm:$0xff]
        %v340 = vld [vmem:[%s275 + $0x18] sm:$0xff]
        %v341 = vld [vmem:[%s275 + $0x20] sm:$0xff]
        %v342 = vld [vmem:[%s275 + $0x28] sm:$0xff]
        %349 = vrot.lane.b32.xlu0 %v337, 126
        %v350 = vpop.permute.xlu0 %349
        %351 = vrot.lane.b32.xlu0 %v338, 126
        %v352 = vpop.permute.xlu0 %351
        %353 = vrot.lane.b32.xlu0 %v339, 126
        %v354 = vpop.permute.xlu0 %353
        %355 = vrot.lane.b32.xlu0 %v340, 126
        %v356 = vpop.permute.xlu0 %355
        %357 = vrot.lane.b32.xlu0 %v341, 126
        %v358 = vpop.permute.xlu0 %357
        %359 = vrot.lane.b32.xlu0 %v342, 126
        %v360 = vpop.permute.xlu0 %359
        %vm361 = vcmask 1031168
        %v362 = vsel %vm361, %v350, %v352
        %v363 = vsel %vm361, %v352, %v354
        %v364 = vsel %vm361, %v356, %v358
        %v365 = vsel %vm361, %v358, %v360
        %370 = vst [vmem:[#allocation2 + $0x40] sm:$0xff] %v362
        %371 = vst [vmem:[#allocation2 + $0x48] sm:$0xff] %v363
        %372 = vst [vmem:[#allocation2 + $0x50] sm:$0xff] %v364
        %373 = vst [vmem:[#allocation2 + $0x58] sm:$0xff] %v365
        %v374 = vld [vmem:[%s275] sm:$0xff]
        %v375 = vld [vmem:[%s275 + $0x8] sm:$0xff]
        %v376 = vld [vmem:[%s275 + $0x10] sm:$0xff]
        %v377 = vld [vmem:[%s275 + $0x18] sm:$0xff]
        %v378 = vld [vmem:[%s275 + $0x20] sm:$0xff]
        %v379 = vld [vmem:[%s275 + $0x28] sm:$0xff]
        %v380 = vsel %vm257, 1, 0
        %v381 = vsel %vm258, 1, 0
        %vm382 = vcmp.eq.s32.totalorder %v380, 1
        %vm383 = vcmp.eq.s32.totalorder %v381, 1
        %390 = vrot.lane.b32.xlu0 %v374, 125
        %v391 = vpop.permute.xlu0 %390
        %392 = vrot.lane.b32.xlu0 %v375, 125
        %v393 = vpop.permute.xlu0 %392
        %394 = vrot.lane.b32.xlu0 %v376, 125
        %v395 = vpop.permute.xlu0 %394
        %396 = vrot.lane.b32.xlu0 %v377, 125
        %v397 = vpop.permute.xlu0 %396
        %398 = vrot.lane.b32.xlu0 %v378, 125
        %v399 = vpop.permute.xlu0 %398
        %400 = vrot.lane.b32.xlu0 %v379, 125
        %v401 = vpop.permute.xlu0 %400
        %vm402 = vcmask 1022976
        %v403 = vsel %vm402, %v391, %v393
        %v404 = vsel %vm402, %v393, %v395
        %v405 = vsel %vm402, %v397, %v399
        %v406 = vsel %vm402, %v399, %v401
        %v411 = vsel %vm382, %v403, 0.0
        %v412 = vsel %vm383, %v404, 0.0
        %v413 = vsel %vm382, %v405, 0.0
        %v414 = vsel %vm383, %v406, 0.0
        %415 = vst [vmem:[#allocation2 + $0x60] sm:$0xff] %v411
        %416 = vst [vmem:[#allocation2 + $0x68] sm:$0xff] %v412
        %417 = vst [vmem:[#allocation2 + $0x70] sm:$0xff] %v413
        %418 = vst [vmem:[#allocation2 + $0x78] sm:$0xff] %v414
        %v419 = vld [vmem:[%s275] sm:$0xff]
        %v420 = vld [vmem:[%s275 + $0x8] sm:$0xff]
        %v421 = vld [vmem:[%s275 + $0x10] sm:$0xff]
        %v422 = vld [vmem:[%s275 + $0x18] sm:$0xff]
        %v423 = vld [vmem:[%s275 + $0x20] sm:$0xff]
        %v424 = vld [vmem:[%s275 + $0x28] sm:$0xff]
        %v425 = vsel %vm265, 1, 0
        %v426 = vsel %vm266, 1, 0
        %vm427 = vcmp.eq.s32.totalorder %v425, 1
        %vm428 = vcmp.eq.s32.totalorder %v426, 1
        %435 = vrot.lane.b32.xlu0 %v419, 124
        %v436 = vpop.permute.xlu0 %435
        %437 = vrot.lane.b32.xlu0 %v420, 124
        %v438 = vpop.permute.xlu0 %437
        %439 = vrot.lane.b32.xlu0 %v421, 124
        %v440 = vpop.permute.xlu0 %439
        %441 = vrot.lane.b32.xlu0 %v422, 124
        %v442 = vpop.permute.xlu0 %441
        %443 = vrot.lane.b32.xlu0 %v423, 124
        %v444 = vpop.permute.xlu0 %443
        %445 = vrot.lane.b32.xlu0 %v424, 124
        %v446 = vpop.permute.xlu0 %445
        %vm447 = vcmask 1014784
        %v448 = vsel %vm447, %v436, %v438
        %v449 = vsel %vm447, %v438, %v440
        %v450 = vsel %vm447, %v442, %v444
        %v451 = vsel %vm447, %v444, %v446
        %v456 = vsel %vm427, %v448, 0.0
        %v457 = vsel %vm428, %v449, 0.0
        %v458 = vsel %vm427, %v450, 0.0
        %v459 = vsel %vm428, %v451, 0.0
        %460 = vst [vmem:[#allocation2 + $0x80] sm:$0xff] %v456
        %461 = vst [vmem:[#allocation2 + $0x88] sm:$0xff] %v457
        %462 = vst [vmem:[#allocation2 + $0x90] sm:$0xff] %v458
        %463 = vst [vmem:[#allocation2 + $0x98] sm:$0xff] %v459
        %v464 = vld [vmem:[%s275] sm:$0xff]
        %v465 = vld [vmem:[%s275 + $0x8] sm:$0xff]
        %v466 = vld [vmem:[%s275 + $0x10] sm:$0xff]
        %v467 = vld [vmem:[%s275 + $0x18] sm:$0xff]
        %v468 = vld [vmem:[%s275 + $0x20] sm:$0xff]
        %v469 = vld [vmem:[%s275 + $0x28] sm:$0xff]
        %476 = vrot.lane.b32.xlu0 %v464, 112
        %v477 = vpop.permute.xlu0 %476
        %478 = vrot.lane.b32.xlu0 %v465, 112
        %v479 = vpop.permute.xlu0 %478
        %480 = vrot.lane.b32.xlu0 %v466, 112
        %v481 = vpop.permute.xlu0 %480
        %482 = vrot.lane.b32.xlu0 %v467, 112
        %v483 = vpop.permute.xlu0 %482
        %484 = vrot.lane.b32.xlu0 %v468, 112
        %v485 = vpop.permute.xlu0 %484
        %486 = vrot.lane.b32.xlu0 %v469, 112
        %v487 = vpop.permute.xlu0 %486
        %vm488 = vcmask 916480
        %v489 = vsel %vm488, %v477, %v479
        %v490 = vsel %vm488, %v479, %v481
        %v491 = vsel %vm488, %v483, %v485
        %v492 = vsel %vm488, %v485, %v487
        %v497 = vsel %vm282, %v489, 0.0
        %v498 = vsel %vm283, %v490, 0.0
        %v499 = vsel %vm282, %v491, 0.0
        %v500 = vsel %vm283, %v492, 0.0
        %501 = vst [vmem:[#allocation2 + $0xa0] sm:$0xff] %v497
        %502 = vst [vmem:[#allocation2 + $0xa8] sm:$0xff] %v498
        %503 = vst [vmem:[#allocation2 + $0xb0] sm:$0xff] %v499
        %504 = vst [vmem:[#allocation2 + $0xb8] sm:$0xff] %v500
        %v505 = vld [vmem:[%s275] sm:$0xff]
        %v506 = vld [vmem:[%s275 + $0x8] sm:$0xff]
        %v507 = vld [vmem:[%s275 + $0x10] sm:$0xff]
        %v508 = vld [vmem:[%s275 + $0x18] sm:$0xff]
        %v509 = vld [vmem:[%s275 + $0x20] sm:$0xff]
        %v510 = vld [vmem:[%s275 + $0x28] sm:$0xff]
        %517 = vrot.lane.b32.xlu0 %v505, 111
        %v518 = vpop.permute.xlu0 %517
        %519 = vrot.lane.b32.xlu0 %v506, 111
        %v520 = vpop.permute.xlu0 %519
        %521 = vrot.lane.b32.xlu0 %v507, 111
        %v522 = vpop.permute.xlu0 %521
        %523 = vrot.lane.b32.xlu0 %v508, 111
        %v524 = vpop.permute.xlu0 %523
        %525 = vrot.lane.b32.xlu0 %v509, 111
        %v526 = vpop.permute.xlu0 %525
        %527 = vrot.lane.b32.xlu0 %v510, 111
        %v528 = vpop.permute.xlu0 %527
        %vm529 = vcmask 908288
        %v530 = vsel %vm529, %v518, %v520
        %v531 = vsel %vm529, %v520, %v522
        %v532 = vsel %vm529, %v524, %v526
        %v533 = vsel %vm529, %v526, %v528
        %v538 = vsel %vm300, %v530, 0.0
        %v539 = vsel %vm301, %v531, 0.0
        %v540 = vsel %vm300, %v532, 0.0
        %v541 = vsel %vm301, %v533, 0.0
        %542 = vst [vmem:[#allocation2 + $0xc0] sm:$0xff] %v538
        %543 = vst [vmem:[#allocation2 + $0xc8] sm:$0xff] %v539
        %544 = vst [vmem:[#allocation2 + $0xd0] sm:$0xff] %v540
        %545 = vst [vmem:[#allocation2 + $0xd8] sm:$0xff] %v541
        %v546 = vld [vmem:[%s275] sm:$0xff]
        %v547 = vld [vmem:[%s275 + $0x8] sm:$0xff]
        %v548 = vld [vmem:[%s275 + $0x10] sm:$0xff]
        %v549 = vld [vmem:[%s275 + $0x18] sm:$0xff]
        %v550 = vld [vmem:[%s275 + $0x20] sm:$0xff]
        %v551 = vld [vmem:[%s275 + $0x28] sm:$0xff]
        %558 = vrot.lane.b32.xlu0 %v546, 110
        %v559 = vpop.permute.xlu0 %558
        %560 = vrot.lane.b32.xlu0 %v547, 110
        %v561 = vpop.permute.xlu0 %560
        %562 = vrot.lane.b32.xlu0 %v548, 110
        %v563 = vpop.permute.xlu0 %562
        %564 = vrot.lane.b32.xlu0 %v549, 110
        %v565 = vpop.permute.xlu0 %564
        %566 = vrot.lane.b32.xlu0 %v550, 110
        %v567 = vpop.permute.xlu0 %566
        %568 = vrot.lane.b32.xlu0 %v551, 110
        %v569 = vpop.permute.xlu0 %568
        %vm570 = vcmask 900096
        %v571 = vsel %vm570, %v559, %v561
        %v572 = vsel %vm570, %v561, %v563
        %v573 = vsel %vm570, %v565, %v567
        %v574 = vsel %vm570, %v567, %v569
        %579 = vst [vmem:[#allocation2 + $0xe0] sm:$0xff] %v571
        %580 = vst [vmem:[#allocation2 + $0xe8] sm:$0xff] %v572
        %581 = vst [vmem:[#allocation2 + $0xf0] sm:$0xff] %v573
        %582 = vst [vmem:[#allocation2 + $0xf8] sm:$0xff] %v574
        %v583 = vld [vmem:[%s275] sm:$0xff]
        %v584 = vld [vmem:[%s275 + $0x8] sm:$0xff]
        %v585 = vld [vmem:[%s275 + $0x10] sm:$0xff]
        %v586 = vld [vmem:[%s275 + $0x18] sm:$0xff]
        %v587 = vld [vmem:[%s275 + $0x20] sm:$0xff]
        %v588 = vld [vmem:[%s275 + $0x28] sm:$0xff]
        %595 = vrot.lane.b32.xlu0 %v583, 109
        %v596 = vpop.permute.xlu0 %595
        %597 = vrot.lane.b32.xlu0 %v584, 109
        %v598 = vpop.permute.xlu0 %597
        %599 = vrot.lane.b32.xlu0 %v585, 109
        %v600 = vpop.permute.xlu0 %599
        %601 = vrot.lane.b32.xlu0 %v586, 109
        %v602 = vpop.permute.xlu0 %601
        %603 = vrot.lane.b32.xlu0 %v587, 109
        %v604 = vpop.permute.xlu0 %603
        %605 = vrot.lane.b32.xlu0 %v588, 109
        %v606 = vpop.permute.xlu0 %605
        %vm607 = vcmask 891904
        %v608 = vsel %vm607, %v596, %v598
        %v609 = vsel %vm607, %v598, %v600
        %v610 = vsel %vm607, %v602, %v604
        %v611 = vsel %vm607, %v604, %v606
        %v616 = vsel %vm382, %v608, 0.0
        %v617 = vsel %vm383, %v609, 0.0
        %v618 = vsel %vm382, %v610, 0.0
        %v619 = vsel %vm383, %v611, 0.0
        %620 = vst [vmem:[#allocation2 + $0x100] sm:$0xff] %v616
        %621 = vst [vmem:[#allocation2 + $0x108] sm:$0xff] %v617
        %622 = vst [vmem:[#allocation2 + $0x110] sm:$0xff] %v618
        %623 = vst [vmem:[#allocation2 + $0x118] sm:$0xff] %v619
        %v624 = vld [vmem:[%s275] sm:$0xff]
        %v625 = vld [vmem:[%s275 + $0x8] sm:$0xff]
        %v626 = vld [vmem:[%s275 + $0x10] sm:$0xff]
        %v627 = vld [vmem:[%s275 + $0x18] sm:$0xff]
        %v628 = vld [vmem:[%s275 + $0x20] sm:$0xff]
        %v629 = vld [vmem:[%s275 + $0x28] sm:$0xff]
        %636 = vrot.lane.b32.xlu0 %v624, 108
        %v637 = vpop.permute.xlu0 %636
        %638 = vrot.lane.b32.xlu0 %v625, 108
        %v639 = vpop.permute.xlu0 %638
        %640 = vrot.lane.b32.xlu0 %v626, 108
        %v641 = vpop.permute.xlu0 %640
        %642 = vrot.lane.b32.xlu0 %v627, 108
        %v643 = vpop.permute.xlu0 %642
        %644 = vrot.lane.b32.xlu0 %v628, 108
        %v645 = vpop.permute.xlu0 %644
        %646 = vrot.lane.b32.xlu0 %v629, 108
        %v647 = vpop.permute.xlu0 %646
        %vm648 = vcmask 883712
        %v649 = vsel %vm648, %v637, %v639
        %v650 = vsel %vm648, %v639, %v641
        %v651 = vsel %vm648, %v643, %v645
        %v652 = vsel %vm648, %v645, %v647
        %v657 = vsel %vm427, %v649, 0.0
        %v658 = vsel %vm428, %v650, 0.0
        %v659 = vsel %vm427, %v651, 0.0
        %v660 = vsel %vm428, %v652, 0.0
        %661 = vst [vmem:[#allocation2 + $0x120] sm:$0xff] %v657
        %662 = vst [vmem:[#allocation2 + $0x128] sm:$0xff] %v658
        %663 = vst [vmem:[#allocation2 + $0x130] sm:$0xff] %v659
        %664 = vst [vmem:[#allocation2 + $0x138] sm:$0xff] %v660
        %v665 = vld [vmem:[%s275] sm:$0xff]
        %v666 = vld [vmem:[%s275 + $0x8] sm:$0xff]
        %v667 = vld [vmem:[%s275 + $0x10] sm:$0xff]
        %v668 = vld [vmem:[%s275 + $0x18] sm:$0xff]
        %v669 = vld [vmem:[%s275 + $0x20] sm:$0xff]
        %v670 = vld [vmem:[%s275 + $0x28] sm:$0xff]
        %677 = vrot.lane.b32.xlu0 %v665, 96
        %v678 = vpop.permute.xlu0 %677
        %679 = vrot.lane.b32.xlu0 %v666, 96
        %v680 = vpop.permute.xlu0 %679
        %681 = vrot.lane.b32.xlu0 %v667, 96
        %v682 = vpop.permute.xlu0 %681
        %683 = vrot.lane.b32.xlu0 %v668, 96
        %v684 = vpop.permute.xlu0 %683
        %685 = vrot.lane.b32.xlu0 %v669, 96
        %v686 = vpop.permute.xlu0 %685
        %687 = vrot.lane.b32.xlu0 %v670, 96
        %v688 = vpop.permute.xlu0 %687
        %vm689 = vcmask 785408
        %v690 = vsel %vm689, %v678, %v680
        %v691 = vsel %vm689, %v680, %v682
        %v692 = vsel %vm689, %v684, %v686
        %v693 = vsel %vm689, %v686, %v688
        %v698 = vsel %vm282, %v690, 0.0
        %v699 = vsel %vm283, %v691, 0.0
        %v700 = vsel %vm282, %v692, 0.0
        %v701 = vsel %vm283, %v693, 0.0
        %702 = vst [vmem:[#allocation2 + $0x140] sm:$0xff] %v698
        %703 = vst [vmem:[#allocation2 + $0x148] sm:$0xff] %v699
        %704 = vst [vmem:[#allocation2 + $0x150] sm:$0xff] %v700
        %705 = vst [vmem:[#allocation2 + $0x158] sm:$0xff] %v701
        %v706 = vld [vmem:[%s275] sm:$0xff]
        %v707 = vld [vmem:[%s275 + $0x8] sm:$0xff]
        %v708 = vld [vmem:[%s275 + $0x10] sm:$0xff]
        %v709 = vld [vmem:[%s275 + $0x18] sm:$0xff]
        %v710 = vld [vmem:[%s275 + $0x20] sm:$0xff]
        %v711 = vld [vmem:[%s275 + $0x28] sm:$0xff]
        %718 = vrot.lane.b32.xlu0 %v706, 95
        %v719 = vpop.permute.xlu0 %718
        %720 = vrot.lane.b32.xlu0 %v707, 95
        %v721 = vpop.permute.xlu0 %720
        %722 = vrot.lane.b32.xlu0 %v708, 95
        %v723 = vpop.permute.xlu0 %722
        %724 = vrot.lane.b32.xlu0 %v709, 95
        %v725 = vpop.permute.xlu0 %724
        %726 = vrot.lane.b32.xlu0 %v710, 95
        %v727 = vpop.permute.xlu0 %726
        %728 = vrot.lane.b32.xlu0 %v711, 95
        %v729 = vpop.permute.xlu0 %728
        %vm730 = vcmask 777216
        %v731 = vsel %vm730, %v719, %v721
        %v732 = vsel %vm730, %v721, %v723
        %v733 = vsel %vm730, %v725, %v727
        %v734 = vsel %vm730, %v727, %v729
        %v739 = vsel %vm300, %v731, 0.0
        %v740 = vsel %vm301, %v732, 0.0
        %v741 = vsel %vm300, %v733, 0.0
        %v742 = vsel %vm301, %v734, 0.0
        %743 = vst [vmem:[#allocation2 + $0x160] sm:$0xff] %v739
        %744 = vst [vmem:[#allocation2 + $0x168] sm:$0xff] %v740
        %745 = vst [vmem:[#allocation2 + $0x170] sm:$0xff] %v741
        %746 = vst [vmem:[#allocation2 + $0x178] sm:$0xff] %v742
        %v747 = vld [vmem:[%s275] sm:$0xff]
        %v748 = vld [vmem:[%s275 + $0x8] sm:$0xff]
        %v749 = vld [vmem:[%s275 + $0x10] sm:$0xff]
        %v750 = vld [vmem:[%s275 + $0x18] sm:$0xff]
        %v751 = vld [vmem:[%s275 + $0x20] sm:$0xff]
        %v752 = vld [vmem:[%s275 + $0x28] sm:$0xff]
        %759 = vrot.lane.b32.xlu0 %v747, 94
        %v760 = vpop.permute.xlu0 %759
        %761 = vrot.lane.b32.xlu0 %v748, 94
        %v762 = vpop.permute.xlu0 %761
        %763 = vrot.lane.b32.xlu0 %v749, 94
        %v764 = vpop.permute.xlu0 %763
        %765 = vrot.lane.b32.xlu0 %v750, 94
        %v766 = vpop.permute.xlu0 %765
        %767 = vrot.lane.b32.xlu0 %v751, 94
        %v768 = vpop.permute.xlu0 %767
        %769 = vrot.lane.b32.xlu0 %v752, 94
        %v770 = vpop.permute.xlu0 %769
        %vm771 = vcmask 769024
        %v772 = vsel %vm771, %v760, %v762
        %v773 = vsel %vm771, %v762, %v764
        %v774 = vsel %vm771, %v766, %v768
        %v775 = vsel %vm771, %v768, %v770
        %780 = vst [vmem:[#allocation2 + $0x180] sm:$0xff] %v772
        %781 = vst [vmem:[#allocation2 + $0x188] sm:$0xff] %v773
        %782 = vst [vmem:[#allocation2 + $0x190] sm:$0xff] %v774
        %783 = vst [vmem:[#allocation2 + $0x198] sm:$0xff] %v775
        %v784 = vld [vmem:[%s275] sm:$0xff]
        %v785 = vld [vmem:[%s275 + $0x8] sm:$0xff]
        %v786 = vld [vmem:[%s275 + $0x10] sm:$0xff]
        %v787 = vld [vmem:[%s275 + $0x18] sm:$0xff]
        %v788 = vld [vmem:[%s275 + $0x20] sm:$0xff]
        %v789 = vld [vmem:[%s275 + $0x28] sm:$0xff]
        %796 = vrot.lane.b32.xlu0 %v784, 93
        %v797 = vpop.permute.xlu0 %796
        %798 = vrot.lane.b32.xlu0 %v785, 93
        %v799 = vpop.permute.xlu0 %798
        %800 = vrot.lane.b32.xlu0 %v786, 93
        %v801 = vpop.permute.xlu0 %800
        %802 = vrot.lane.b32.xlu0 %v787, 93
        %v803 = vpop.permute.xlu0 %802
        %804 = vrot.lane.b32.xlu0 %v788, 93
        %v805 = vpop.permute.xlu0 %804
        %806 = vrot.lane.b32.xlu0 %v789, 93
        %v807 = vpop.permute.xlu0 %806
        %vm808 = vcmask 760832
        %v809 = vsel %vm808, %v797, %v799
        %v810 = vsel %vm808, %v799, %v801
        %v811 = vsel %vm808, %v803, %v805
        %v812 = vsel %vm808, %v805, %v807
        %v817 = vsel %vm382, %v809, 0.0
        %v818 = vsel %vm383, %v810, 0.0
        %v819 = vsel %vm382, %v811, 0.0
        %v820 = vsel %vm383, %v812, 0.0
        %821 = vst [vmem:[#allocation2 + $0x1a0] sm:$0xff] %v817
        %822 = vst [vmem:[#allocation2 + $0x1a8] sm:$0xff] %v818
        %823 = vst [vmem:[#allocation2 + $0x1b0] sm:$0xff] %v819
        %824 = vst [vmem:[#allocation2 + $0x1b8] sm:$0xff] %v820
        %v825 = vld [vmem:[%s275] sm:$0xff]
        %v826 = vld [vmem:[%s275 + $0x8] sm:$0xff]
        %v827 = vld [vmem:[%s275 + $0x10] sm:$0xff]
        %v828 = vld [vmem:[%s275 + $0x18] sm:$0xff]
        %v829 = vld [vmem:[%s275 + $0x20] sm:$0xff]
        %v830 = vld [vmem:[%s275 + $0x28] sm:$0xff]
        %837 = vrot.lane.b32.xlu0 %v825, 92
        %v838 = vpop.permute.xlu0 %837
        %839 = vrot.lane.b32.xlu0 %v826, 92
        %v840 = vpop.permute.xlu0 %839
        %841 = vrot.lane.b32.xlu0 %v827, 92
        %v842 = vpop.permute.xlu0 %841
        %843 = vrot.lane.b32.xlu0 %v828, 92
        %v844 = vpop.permute.xlu0 %843
        %845 = vrot.lane.b32.xlu0 %v829, 92
        %v846 = vpop.permute.xlu0 %845
        %847 = vrot.lane.b32.xlu0 %v830, 92
        %v848 = vpop.permute.xlu0 %847
        %vm849 = vcmask 752640
        %v850 = vsel %vm849, %v838, %v840
        %v851 = vsel %vm849, %v840, %v842
        %v852 = vsel %vm849, %v844, %v846
        %v853 = vsel %vm849, %v846, %v848
        %v858 = vsel %vm427, %v850, 0.0
        %v859 = vsel %vm428, %v851, 0.0
        %v860 = vsel %vm427, %v852, 0.0
        %v861 = vsel %vm428, %v853, 0.0
        %862 = vst [vmem:[#allocation2 + $0x1c0] sm:$0xff] %v858
        %863 = vst [vmem:[#allocation2 + $0x1c8] sm:$0xff] %v859
        %864 = vst [vmem:[#allocation2 + $0x1d0] sm:$0xff] %v860
        %865 = vst [vmem:[#allocation2 + $0x1d8] sm:$0xff] %v861
        %v866 = vld [vmem:[%s275] sm:$0xff]
        %v867 = vld [vmem:[%s275 + $0x8] sm:$0xff]
        %v868 = vld [vmem:[%s275 + $0x10] sm:$0xff]
        %v869 = vld [vmem:[%s275 + $0x18] sm:$0xff]
        %v870 = vld [vmem:[%s275 + $0x20] sm:$0xff]
        %v871 = vld [vmem:[%s275 + $0x28] sm:$0xff]
        %878 = vrot.lane.b32.xlu0 %v866, 80
        %v879 = vpop.permute.xlu0 %878
        %880 = vrot.lane.b32.xlu0 %v867, 80
        %v881 = vpop.permute.xlu0 %880
        %882 = vrot.lane.b32.xlu0 %v868, 80
        %v883 = vpop.permute.xlu0 %882
        %884 = vrot.lane.b32.xlu0 %v869, 80
        %v885 = vpop.permute.xlu0 %884
        %886 = vrot.lane.b32.xlu0 %v870, 80
        %v887 = vpop.permute.xlu0 %886
        %888 = vrot.lane.b32.xlu0 %v871, 80
        %v889 = vpop.permute.xlu0 %888
        %vm890 = vcmask 654336
        %v891 = vsel %vm890, %v879, %v881
        %v892 = vsel %vm890, %v881, %v883
        %v893 = vsel %vm890, %v885, %v887
        %v894 = vsel %vm890, %v887, %v889
        %v899 = vsel %vm282, %v891, 0.0
        %v900 = vsel %vm283, %v892, 0.0
        %v901 = vsel %vm282, %v893, 0.0
        %v902 = vsel %vm283, %v894, 0.0
        %903 = vst [vmem:[#allocation2 + $0x1e0] sm:$0xff] %v899
        %904 = vst [vmem:[#allocation2 + $0x1e8] sm:$0xff] %v900
        %905 = vst [vmem:[#allocation2 + $0x1f0] sm:$0xff] %v901
        %906 = vst [vmem:[#allocation2 + $0x1f8] sm:$0xff] %v902
        %v907 = vld [vmem:[%s275] sm:$0xff]
        %v908 = vld [vmem:[%s275 + $0x8] sm:$0xff]
        %v909 = vld [vmem:[%s275 + $0x10] sm:$0xff]
        %v910 = vld [vmem:[%s275 + $0x18] sm:$0xff]
        %v911 = vld [vmem:[%s275 + $0x20] sm:$0xff]
        %v912 = vld [vmem:[%s275 + $0x28] sm:$0xff]
        %919 = vrot.lane.b32.xlu0 %v907, 79
        %v920 = vpop.permute.xlu0 %919
        %921 = vrot.lane.b32.xlu0 %v908, 79
        %v922 = vpop.permute.xlu0 %921
        %923 = vrot.lane.b32.xlu0 %v909, 79
        %v924 = vpop.permute.xlu0 %923
        %925 = vrot.lane.b32.xlu0 %v910, 79
        %v926 = vpop.permute.xlu0 %925
        %927 = vrot.lane.b32.xlu0 %v911, 79
        %v928 = vpop.permute.xlu0 %927
        %929 = vrot.lane.b32.xlu0 %v912, 79
        %v930 = vpop.permute.xlu0 %929
        %vm931 = vcmask 646144
        %v932 = vsel %vm931, %v920, %v922
        %v933 = vsel %vm931, %v922, %v924
        %v934 = vsel %vm931, %v926, %v928
        %v935 = vsel %vm931, %v928, %v930
        %v940 = vsel %vm300, %v932, 0.0
        %v941 = vsel %vm301, %v933, 0.0
        %v942 = vsel %vm300, %v934, 0.0
        %v943 = vsel %vm301, %v935, 0.0
        %944 = vst [vmem:[#allocation2 + $0x200] sm:$0xff] %v940
        %945 = vst [vmem:[#allocation2 + $0x208] sm:$0xff] %v941
        %946 = vst [vmem:[#allocation2 + $0x210] sm:$0xff] %v942
        %947 = vst [vmem:[#allocation2 + $0x218] sm:$0xff] %v943
        %v948 = vld [vmem:[%s275] sm:$0xff]
        %v949 = vld [vmem:[%s275 + $0x8] sm:$0xff]
        %v950 = vld [vmem:[%s275 + $0x10] sm:$0xff]
        %v951 = vld [vmem:[%s275 + $0x18] sm:$0xff]
        %v952 = vld [vmem:[%s275 + $0x20] sm:$0xff]
        %v953 = vld [vmem:[%s275 + $0x28] sm:$0xff]
        %960 = vrot.lane.b32.xlu0 %v948, 78
        %v961 = vpop.permute.xlu0 %960
        %962 = vrot.lane.b32.xlu0 %v949, 78
        %v963 = vpop.permute.xlu0 %962
        %964 = vrot.lane.b32.xlu0 %v950, 78
        %v965 = vpop.permute.xlu0 %964
        %966 = vrot.lane.b32.xlu0 %v951, 78
        %v967 = vpop.permute.xlu0 %966
        %968 = vrot.lane.b32.xlu0 %v952, 78
        %v969 = vpop.permute.xlu0 %968
        %970 = vrot.lane.b32.xlu0 %v953, 78
        %v971 = vpop.permute.xlu0 %970
        %vm972 = vcmask 637952
        %v973 = vsel %vm972, %v961, %v963
        %v974 = vsel %vm972, %v963, %v965
        %v975 = vsel %vm972, %v967, %v969
        %v976 = vsel %vm972, %v969, %v971
        %981 = vst [vmem:[#allocation2 + $0x220] sm:$0xff] %v973
        %982 = vst [vmem:[#allocation2 + $0x228] sm:$0xff] %v974
        %983 = vst [vmem:[#allocation2 + $0x230] sm:$0xff] %v975
        %984 = vst [vmem:[#allocation2 + $0x238] sm:$0xff] %v976
        %v985 = vld [vmem:[%s275] sm:$0xff]
        %v986 = vld [vmem:[%s275 + $0x8] sm:$0xff]
        %v987 = vld [vmem:[%s275 + $0x10] sm:$0xff]
        %v988 = vld [vmem:[%s275 + $0x18] sm:$0xff]
        %v989 = vld [vmem:[%s275 + $0x20] sm:$0xff]
        %v990 = vld [vmem:[%s275 + $0x28] sm:$0xff]
        %997 = vrot.lane.b32.xlu0 %v985, 77
        %v998 = vpop.permute.xlu0 %997
        %999 = vrot.lane.b32.xlu0 %v986, 77
        %v1000 = vpop.permute.xlu0 %999
        %1001 = vrot.lane.b32.xlu0 %v987, 77
        %v1002 = vpop.permute.xlu0 %1001
        %1003 = vrot.lane.b32.xlu0 %v988, 77
        %v1004 = vpop.permute.xlu0 %1003
        %1005 = vrot.lane.b32.xlu0 %v989, 77
        %v1006 = vpop.permute.xlu0 %1005
        %1007 = vrot.lane.b32.xlu0 %v990, 77
        %v1008 = vpop.permute.xlu0 %1007
        %vm1009 = vcmask 629760
        %v1010 = vsel %vm1009, %v998, %v1000
        %v1011 = vsel %vm1009, %v1000, %v1002
        %v1012 = vsel %vm1009, %v1004, %v1006
        %v1013 = vsel %vm1009, %v1006, %v1008
        %v1018 = vsel %vm382, %v1010, 0.0
        %v1019 = vsel %vm383, %v1011, 0.0
        %v1020 = vsel %vm382, %v1012, 0.0
        %v1021 = vsel %vm383, %v1013, 0.0
        %1022 = vst [vmem:[#allocation2 + $0x240] sm:$0xff] %v1018
        %1023 = vst [vmem:[#allocation2 + $0x248] sm:$0xff] %v1019
        %1024 = vst [vmem:[#allocation2 + $0x250] sm:$0xff] %v1020
        %1025 = vst [vmem:[#allocation2 + $0x258] sm:$0xff] %v1021
        %v1026 = vld [vmem:[%s275] sm:$0xff]
        %v1027 = vld [vmem:[%s275 + $0x8] sm:$0xff]
        %v1028 = vld [vmem:[%s275 + $0x10] sm:$0xff]
        %v1029 = vld [vmem:[%s275 + $0x18] sm:$0xff]
        %v1030 = vld [vmem:[%s275 + $0x20] sm:$0xff]
        %v1031 = vld [vmem:[%s275 + $0x28] sm:$0xff]
        %1038 = vrot.lane.b32.xlu0 %v1026, 76
        %v1039 = vpop.permute.xlu0 %1038
        %1040 = vrot.lane.b32.xlu0 %v1027, 76
        %v1041 = vpop.permute.xlu0 %1040
        %1042 = vrot.lane.b32.xlu0 %v1028, 76
        %v1043 = vpop.permute.xlu0 %1042
        %1044 = vrot.lane.b32.xlu0 %v1029, 76
        %v1045 = vpop.permute.xlu0 %1044
        %1046 = vrot.lane.b32.xlu0 %v1030, 76
        %v1047 = vpop.permute.xlu0 %1046
        %1048 = vrot.lane.b32.xlu0 %v1031, 76
        %v1049 = vpop.permute.xlu0 %1048
        %vm1050 = vcmask 621568
        %v1051 = vsel %vm1050, %v1039, %v1041
        %v1052 = vsel %vm1050, %v1041, %v1043
        %v1053 = vsel %vm1050, %v1045, %v1047
        %v1054 = vsel %vm1050, %v1047, %v1049
        %v1059 = vsel %vm427, %v1051, 0.0
        %v1060 = vsel %vm428, %v1052, 0.0
        %v1061 = vsel %vm427, %v1053, 0.0
        %v1062 = vsel %vm428, %v1054, 0.0
        %1063 = vst [vmem:[#allocation2 + $0x260] sm:$0xff] %v1059
        %1064 = vst [vmem:[#allocation2 + $0x268] sm:$0xff] %v1060
        %1065 = vst [vmem:[#allocation2 + $0x270] sm:$0xff] %v1061
        %1066 = vst [vmem:[#allocation2 + $0x278] sm:$0xff] %v1062
        %v1067 = vld [vmem:[%s275] sm:$0xff]
        %v1068 = vld [vmem:[%s275 + $0x8] sm:$0xff]
        %v1069 = vld [vmem:[%s275 + $0x10] sm:$0xff]
        %v1070 = vld [vmem:[%s275 + $0x18] sm:$0xff]
        %v1071 = vld [vmem:[%s275 + $0x20] sm:$0xff]
        %v1072 = vld [vmem:[%s275 + $0x28] sm:$0xff]
        %1079 = vrot.lane.b32.xlu0 %v1067, 64
        %v1080 = vpop.permute.xlu0 %1079
        %1081 = vrot.lane.b32.xlu0 %v1068, 64
        %v1082 = vpop.permute.xlu0 %1081
        %1083 = vrot.lane.b32.xlu0 %v1069, 64
        %v1084 = vpop.permute.xlu0 %1083
        %1085 = vrot.lane.b32.xlu0 %v1070, 64
        %v1086 = vpop.permute.xlu0 %1085
        %1087 = vrot.lane.b32.xlu0 %v1071, 64
        %v1088 = vpop.permute.xlu0 %1087
        %1089 = vrot.lane.b32.xlu0 %v1072, 64
        %v1090 = vpop.permute.xlu0 %1089
        %vm1091 = vcmask 523264
        %v1092 = vsel %vm1091, %v1080, %v1082
        %v1093 = vsel %vm1091, %v1082, %v1084
        %v1094 = vsel %vm1091, %v1086, %v1088
        %v1095 = vsel %vm1091, %v1088, %v1090
        %v1100 = vsel %vm282, %v1092, 0.0
        %v1101 = vsel %vm283, %v1093, 0.0
        %v1102 = vsel %vm282, %v1094, 0.0
        %v1103 = vsel %vm283, %v1095, 0.0
        %1104 = vst [vmem:[#allocation2 + $0x280] sm:$0xff] %v1100
        %1105 = vst [vmem:[#allocation2 + $0x288] sm:$0xff] %v1101
        %1106 = vst [vmem:[#allocation2 + $0x290] sm:$0xff] %v1102
        %1107 = vst [vmem:[#allocation2 + $0x298] sm:$0xff] %v1103
        %v1108 = vld [vmem:[%s275] sm:$0xff]
        %v1109 = vld [vmem:[%s275 + $0x8] sm:$0xff]
        %v1110 = vld [vmem:[%s275 + $0x10] sm:$0xff]
        %v1111 = vld [vmem:[%s275 + $0x18] sm:$0xff]
        %v1112 = vld [vmem:[%s275 + $0x20] sm:$0xff]
        %v1113 = vld [vmem:[%s275 + $0x28] sm:$0xff]
        %1120 = vrot.lane.b32.xlu0 %v1108, 63
        %v1121 = vpop.permute.xlu0 %1120
        %1122 = vrot.lane.b32.xlu0 %v1109, 63
        %v1123 = vpop.permute.xlu0 %1122
        %1124 = vrot.lane.b32.xlu0 %v1110, 63
        %v1125 = vpop.permute.xlu0 %1124
        %1126 = vrot.lane.b32.xlu0 %v1111, 63
        %v1127 = vpop.permute.xlu0 %1126
        %1128 = vrot.lane.b32.xlu0 %v1112, 63
        %v1129 = vpop.permute.xlu0 %1128
        %1130 = vrot.lane.b32.xlu0 %v1113, 63
        %v1131 = vpop.permute.xlu0 %1130
        %vm1132 = vcmask 515072
        %v1133 = vsel %vm1132, %v1121, %v1123
        %v1134 = vsel %vm1132, %v1123, %v1125
        %v1135 = vsel %vm1132, %v1127, %v1129
        %v1136 = vsel %vm1132, %v1129, %v1131
        %v1141 = vsel %vm300, %v1133, 0.0
        %v1142 = vsel %vm301, %v1134, 0.0
        %v1143 = vsel %vm300, %v1135, 0.0
        %v1144 = vsel %vm301, %v1136, 0.0
        %1145 = vst [vmem:[#allocation2 + $0x2a0] sm:$0xff] %v1141
        %1146 = vst [vmem:[#allocation2 + $0x2a8] sm:$0xff] %v1142
        %1147 = vst [vmem:[#allocation2 + $0x2b0] sm:$0xff] %v1143
        %1148 = vst [vmem:[#allocation2 + $0x2b8] sm:$0xff] %v1144
        %v1149 = vld [vmem:[%s275] sm:$0xff]
        %v1150 = vld [vmem:[%s275 + $0x8] sm:$0xff]
        %v1151 = vld [vmem:[%s275 + $0x10] sm:$0xff]
        %v1152 = vld [vmem:[%s275 + $0x18] sm:$0xff]
        %v1153 = vld [vmem:[%s275 + $0x20] sm:$0xff]
        %v1154 = vld [vmem:[%s275 + $0x28] sm:$0xff]
        %1161 = vrot.lane.b32.xlu0 %v1149, 62
        %v1162 = vpop.permute.xlu0 %1161
        %1163 = vrot.lane.b32.xlu0 %v1150, 62
        %v1164 = vpop.permute.xlu0 %1163
        %1165 = vrot.lane.b32.xlu0 %v1151, 62
        %v1166 = vpop.permute.xlu0 %1165
        %1167 = vrot.lane.b32.xlu0 %v1152, 62
        %v1168 = vpop.permute.xlu0 %1167
        %1169 = vrot.lane.b32.xlu0 %v1153, 62
        %v1170 = vpop.permute.xlu0 %1169
        %1171 = vrot.lane.b32.xlu0 %v1154, 62
        %v1172 = vpop.permute.xlu0 %1171
        %vm1173 = vcmask 506880
        %v1174 = vsel %vm1173, %v1162, %v1164
        %v1175 = vsel %vm1173, %v1164, %v1166
        %v1176 = vsel %vm1173, %v1168, %v1170
        %v1177 = vsel %vm1173, %v1170, %v1172
        %1182 = vst [vmem:[#allocation2 + $0x2c0] sm:$0xff] %v1174
        %1183 = vst [vmem:[#allocation2 + $0x2c8] sm:$0xff] %v1175
        %1184 = vst [vmem:[#allocation2 + $0x2d0] sm:$0xff] %v1176
        %1185 = vst [vmem:[#allocation2 + $0x2d8] sm:$0xff] %v1177
        %v1186 = vld [vmem:[%s275] sm:$0xff]
        %v1187 = vld [vmem:[%s275 + $0x8] sm:$0xff]
        %v1188 = vld [vmem:[%s275 + $0x10] sm:$0xff]
        %v1189 = vld [vmem:[%s275 + $0x18] sm:$0xff]
        %v1190 = vld [vmem:[%s275 + $0x20] sm:$0xff]
        %v1191 = vld [vmem:[%s275 + $0x28] sm:$0xff]
        %1198 = vrot.lane.b32.xlu0 %v1186, 61
        %v1199 = vpop.permute.xlu0 %1198
        %1200 = vrot.lane.b32.xlu0 %v1187, 61
        %v1201 = vpop.permute.xlu0 %1200
        %1202 = vrot.lane.b32.xlu0 %v1188, 61
        %v1203 = vpop.permute.xlu0 %1202
        %1204 = vrot.lane.b32.xlu0 %v1189, 61
        %v1205 = vpop.permute.xlu0 %1204
        %1206 = vrot.lane.b32.xlu0 %v1190, 61
        %v1207 = vpop.permute.xlu0 %1206
        %1208 = vrot.lane.b32.xlu0 %v1191, 61
        %v1209 = vpop.permute.xlu0 %1208
        %vm1210 = vcmask 498688
        %v1211 = vsel %vm1210, %v1199, %v1201
        %v1212 = vsel %vm1210, %v1201, %v1203
        %v1213 = vsel %vm1210, %v1205, %v1207
        %v1214 = vsel %vm1210, %v1207, %v1209
        %v1219 = vsel %vm382, %v1211, 0.0
        %v1220 = vsel %vm383, %v1212, 0.0
        %v1221 = vsel %vm382, %v1213, 0.0
        %v1222 = vsel %vm383, %v1214, 0.0
        %1223 = vst [vmem:[#allocation2 + $0x2e0] sm:$0xff] %v1219
        %1224 = vst [vmem:[#allocation2 + $0x2e8] sm:$0xff] %v1220
        %1225 = vst [vmem:[#allocation2 + $0x2f0] sm:$0xff] %v1221
        %1226 = vst [vmem:[#allocation2 + $0x2f8] sm:$0xff] %v1222
        %v1227 = vld [vmem:[%s275] sm:$0xff]
        %v1228 = vld [vmem:[%s275 + $0x8] sm:$0xff]
        %v1229 = vld [vmem:[%s275 + $0x10] sm:$0xff]
        %v1230 = vld [vmem:[%s275 + $0x18] sm:$0xff]
        %v1231 = vld [vmem:[%s275 + $0x20] sm:$0xff]
        %v1232 = vld [vmem:[%s275 + $0x28] sm:$0xff]
        %1239 = vrot.lane.b32.xlu0 %v1227, 60
        %v1240 = vpop.permute.xlu0 %1239
        %1241 = vrot.lane.b32.xlu0 %v1228, 60
        %v1242 = vpop.permute.xlu0 %1241
        %1243 = vrot.lane.b32.xlu0 %v1229, 60
        %v1244 = vpop.permute.xlu0 %1243
        %1245 = vrot.lane.b32.xlu0 %v1230, 60
        %v1246 = vpop.permute.xlu0 %1245
        %1247 = vrot.lane.b32.xlu0 %v1231, 60
        %v1248 = vpop.permute.xlu0 %1247
        %1249 = vrot.lane.b32.xlu0 %v1232, 60
        %v1250 = vpop.permute.xlu0 %1249
        %vm1251 = vcmask 490496
        %v1252 = vsel %vm1251, %v1240, %v1242
        %v1253 = vsel %vm1251, %v1242, %v1244
        %v1254 = vsel %vm1251, %v1246, %v1248
        %v1255 = vsel %vm1251, %v1248, %v1250
        %v1260 = vsel %vm427, %v1252, 0.0
        %v1261 = vsel %vm428, %v1253, 0.0
        %v1262 = vsel %vm427, %v1254, 0.0
        %v1263 = vsel %vm428, %v1255, 0.0
        %1264 = vst [vmem:[#allocation2 + $0x300] sm:$0xff] %v1260
        %1265 = vst [vmem:[#allocation2 + $0x308] sm:$0xff] %v1261
        %1266 = vst [vmem:[#allocation2 + $0x310] sm:$0xff] %v1262
        %1267 = vst [vmem:[#allocation2 + $0x318] sm:$0xff] %v1263
        %v1268 = vld [vmem:[%s1] sm:$0xff]
        %v1269 = vld [vmem:[%s1 + $0x8] sm:$0xff]
        %v1270 = vld [vmem:[%s1 + $0x10] sm:$0xff]
        %v1271 = vld [vmem:[%s1 + $0x18] sm:$0xff]
        %v1272 = vld [vmem:[%s1 + $0x20] sm:$0xff]
        %v1273 = vld [vmem:[%s1 + $0x28] sm:$0xff]
        %v1274 = vld [vmem:[%s1 + $0x30] sm:$0xff]
        %v1275 = vld [vmem:[%s1 + $0x38] sm:$0xff]
        %v1276 = vld [vmem:[%s1 + $0x40] sm:$0xff]
        %v1277 = vld [vmem:[%s1 + $0x48] sm:$0xff]
        %v1278 = vld [vmem:[%s1 + $0x50] sm:$0xff]
        %v1279 = vld [vmem:[%s1 + $0x58] sm:$0xff]
        %v1280 = vld [vmem:[%s1 + $0x60] sm:$0xff]
        %v1281 = vld [vmem:[%s1 + $0x68] sm:$0xff]
        %v1282 = vld [vmem:[%s1 + $0x70] sm:$0xff]
        %v1283 = vld [vmem:[%s1 + $0x78] sm:$0xff]
        %v1284 = vld [vmem:[%s1 + $0x80] sm:$0xff]
        %v1285 = vld [vmem:[%s1 + $0x88] sm:$0xff]
        %v1286 = vld [vmem:[%s1 + $0x90] sm:$0xff]
        %v1287 = vld [vmem:[%s1 + $0x98] sm:$0xff]
        %v1288 = vld [vmem:[%s1 + $0xa0] sm:$0xff]
        %v1289 = vld [vmem:[%s1 + $0xa8] sm:$0xff]
        %v1290 = vld [vmem:[%s1 + $0xb0] sm:$0xff]
        %v1291 = vld [vmem:[%s1 + $0xb8] sm:$0xff]
        %v1292 = vld [vmem:[%s1 + $0xc0] sm:$0xff]
        %v1293 = vld [vmem:[%s1 + $0xc8] sm:$0xff]
        %v1294 = vld [vmem:[%s1 + $0xd0] sm:$0xff]
        %v1295 = vld [vmem:[%s1 + $0xd8] sm:$0xff]
        %v1296 = vld [vmem:[%s1 + $0xe0] sm:$0xff]
        %v1297 = vld [vmem:[%s1 + $0xe8] sm:$0xff]
        %v1298 = vld [vmem:[%s1 + $0xf0] sm:$0xff]
        %v1299 = vld [vmem:[%s1 + $0xf8] sm:$0xff]
        %v1300 = vld [vmem:[%s1 + $0x100] sm:$0xff]
        %v1301 = vld [vmem:[%s1 + $0x108] sm:$0xff]
        %v1302 = vld [vmem:[%s1 + $0x110] sm:$0xff]
        %v1303 = vld [vmem:[%s1 + $0x118] sm:$0xff]
        %v1304 = vld [vmem:[%s1 + $0x120] sm:$0xff]
        %v1305 = vld [vmem:[%s1 + $0x128] sm:$0xff]
        %v1306 = vld [vmem:[%s1 + $0x130] sm:$0xff]
        %v1307 = vld [vmem:[%s1 + $0x138] sm:$0xff]
        %v1308 = vld [vmem:[%s1 + $0x140] sm:$0xff]
        %v1309 = vld [vmem:[%s1 + $0x148] sm:$0xff]
        %v1310 = vld [vmem:[%s1 + $0x150] sm:$0xff]
        %v1311 = vld [vmem:[%s1 + $0x158] sm:$0xff]
        %v1312 = vld [vmem:[%s1 + $0x160] sm:$0xff]
        %v1313 = vld [vmem:[%s1 + $0x168] sm:$0xff]
        %v1314 = vld [vmem:[%s1 + $0x170] sm:$0xff]
        %v1315 = vld [vmem:[%s1 + $0x178] sm:$0xff]
        %v1316 = vld [vmem:[%s1 + $0x180] sm:$0xff]
        %v1317 = vld [vmem:[%s1 + $0x188] sm:$0xff]
        %v1318 = vld [vmem:[%s1 + $0x190] sm:$0xff]
        %v1319 = vld [vmem:[%s1 + $0x198] sm:$0xff]
        %v1320 = vld [vmem:[%s1 + $0x1a0] sm:$0xff]
        %v1321 = vld [vmem:[%s1 + $0x1a8] sm:$0xff]
        %v1322 = vld [vmem:[%s1 + $0x1b0] sm:$0xff]
        %v1323 = vld [vmem:[%s1 + $0x1b8] sm:$0xff]
        %v1324 = vld [vmem:[%s1 + $0x1c0] sm:$0xff]
        %v1325 = vld [vmem:[%s1 + $0x1c8] sm:$0xff]
        %v1326 = vld [vmem:[%s1 + $0x1d0] sm:$0xff]
        %v1327 = vld [vmem:[%s1 + $0x1d8] sm:$0xff]
        %v1328 = vld [vmem:[%s1 + $0x1e0] sm:$0xff]
        %v1329 = vld [vmem:[%s1 + $0x1e8] sm:$0xff]
        %v1330 = vld [vmem:[%s1 + $0x1f0] sm:$0xff]
        %v1331 = vld [vmem:[%s1 + $0x1f8] sm:$0xff]
        %v1332 = vld [vmem:[#allocation2] sm:$0xff]
        %v1333 = vld [vmem:[#allocation2 + $0x8] sm:$0xff]
        %v1334 = vld [vmem:[#allocation2 + $0x10] sm:$0xff]
        %v1335 = vld [vmem:[#allocation2 + $0x18] sm:$0xff]
        %v1336 = vld [vmem:[#allocation2 + $0x20] sm:$0xff]
        %v1337 = vld [vmem:[#allocation2 + $0x28] sm:$0xff]
        %v1338 = vld [vmem:[#allocation2 + $0x30] sm:$0xff]
        %v1339 = vld [vmem:[#allocation2 + $0x38] sm:$0xff]
        %v1340 = vld [vmem:[#allocation2 + $0x40] sm:$0xff]
        %v1341 = vld [vmem:[#allocation2 + $0x48] sm:$0xff]
        %v1342 = vld [vmem:[#allocation2 + $0x50] sm:$0xff]
        %v1343 = vld [vmem:[#allocation2 + $0x58] sm:$0xff]
        %v1344 = vld [vmem:[#allocation2 + $0x60] sm:$0xff]
        %v1345 = vld [vmem:[#allocation2 + $0x68] sm:$0xff]
        %v1346 = vld [vmem:[#allocation2 + $0x70] sm:$0xff]
        %v1347 = vld [vmem:[#allocation2 + $0x78] sm:$0xff]
        %v1348 = vld [vmem:[#allocation2 + $0x80] sm:$0xff]
        %v1349 = vld [vmem:[#allocation2 + $0x88] sm:$0xff]
        %v1350 = vld [vmem:[#allocation2 + $0x90] sm:$0xff]
        %v1351 = vld [vmem:[#allocation2 + $0x98] sm:$0xff]
        %v1352 = vld [vmem:[#allocation2 + $0xa0] sm:$0xff]
        %v1353 = vld [vmem:[#allocation2 + $0xa8] sm:$0xff]
        %v1354 = vld [vmem:[#allocation2 + $0xb0] sm:$0xff]
        %v1355 = vld [vmem:[#allocation2 + $0xb8] sm:$0xff]
        %v1356 = vld [vmem:[#allocation2 + $0xc0] sm:$0xff]
        %v1357 = vld [vmem:[#allocation2 + $0xc8] sm:$0xff]
        %v1358 = vld [vmem:[#allocation2 + $0xd0] sm:$0xff]
        %v1359 = vld [vmem:[#allocation2 + $0xd8] sm:$0xff]
        %v1360 = vld [vmem:[#allocation2 + $0xe0] sm:$0xff]
        %v1361 = vld [vmem:[#allocation2 + $0xe8] sm:$0xff]
        %v1362 = vld [vmem:[#allocation2 + $0xf0] sm:$0xff]
        %v1363 = vld [vmem:[#allocation2 + $0xf8] sm:$0xff]
        %v1364 = vld [vmem:[#allocation2 + $0x100] sm:$0xff]
        %v1365 = vld [vmem:[#allocation2 + $0x108] sm:$0xff]
        %v1366 = vld [vmem:[#allocation2 + $0x110] sm:$0xff]
        %v1367 = vld [vmem:[#allocation2 + $0x118] sm:$0xff]
        %v1368 = vld [vmem:[#allocation2 + $0x120] sm:$0xff]
        %v1369 = vld [vmem:[#allocation2 + $0x128] sm:$0xff]
        %v1370 = vld [vmem:[#allocation2 + $0x130] sm:$0xff]
        %v1371 = vld [vmem:[#allocation2 + $0x138] sm:$0xff]
        %v1372 = vld [vmem:[#allocation2 + $0x140] sm:$0xff]
        %v1373 = vld [vmem:[#allocation2 + $0x148] sm:$0xff]
        %v1374 = vld [vmem:[#allocation2 + $0x150] sm:$0xff]
        %v1375 = vld [vmem:[#allocation2 + $0x158] sm:$0xff]
        %v1376 = vld [vmem:[#allocation2 + $0x160] sm:$0xff]
        %v1377 = vld [vmem:[#allocation2 + $0x168] sm:$0xff]
        %v1378 = vld [vmem:[#allocation2 + $0x170] sm:$0xff]
        %v1379 = vld [vmem:[#allocation2 + $0x178] sm:$0xff]
        %v1380 = vld [vmem:[#allocation2 + $0x180] sm:$0xff]
        %v1381 = vld [vmem:[#allocation2 + $0x188] sm:$0xff]
        %v1382 = vld [vmem:[#allocation2 + $0x190] sm:$0xff]
        %v1383 = vld [vmem:[#allocation2 + $0x198] sm:$0xff]
        %v1384 = vld [vmem:[#allocation2 + $0x1a0] sm:$0xff]
        %v1385 = vld [vmem:[#allocation2 + $0x1a8] sm:$0xff]
        %v1386 = vld [vmem:[#allocation2 + $0x1b0] sm:$0xff]
        %v1387 = vld [vmem:[#allocation2 + $0x1b8] sm:$0xff]
        %v1388 = vld [vmem:[#allocation2 + $0x1c0] sm:$0xff]
        %v1389 = vld [vmem:[#allocation2 + $0x1c8] sm:$0xff]
        %v1390 = vld [vmem:[#allocation2 + $0x1d0] sm:$0xff]
        %v1391 = vld [vmem:[#allocation2 + $0x1d8] sm:$0xff]
        %v1392 = vld [vmem:[#allocation2 + $0x1e0] sm:$0xff]
        %v1393 = vld [vmem:[#allocation2 + $0x1e8] sm:$0xff]
        %v1394 = vld [vmem:[#allocation2 + $0x1f0] sm:$0xff]
        %v1395 = vld [vmem:[#allocation2 + $0x1f8] sm:$0xff]
        %v1396 = vld [vmem:[#allocation2 + $0x200] sm:$0xff]
        %v1397 = vld [vmem:[#allocation2 + $0x208] sm:$0xff]
        %v1398 = vld [vmem:[#allocation2 + $0x210] sm:$0xff]
        %v1399 = vld [vmem:[#allocation2 + $0x218] sm:$0xff]
        %v1400 = vld [vmem:[#allocation2 + $0x220] sm:$0xff]
        %v1401 = vld [vmem:[#allocation2 + $0x228] sm:$0xff]
        %v1402 = vld [vmem:[#allocation2 + $0x230] sm:$0xff]
        %v1403 = vld [vmem:[#allocation2 + $0x238] sm:$0xff]
        %v1404 = vld [vmem:[#allocation2 + $0x240] sm:$0xff]
        %v1405 = vld [vmem:[#allocation2 + $0x248] sm:$0xff]
        %v1406 = vld [vmem:[#allocation2 + $0x250] sm:$0xff]
        %v1407 = vld [vmem:[#allocation2 + $0x258] sm:$0xff]
        %v1408 = vld [vmem:[#allocation2 + $0x260] sm:$0xff]
        %v1409 = vld [vmem:[#allocation2 + $0x268] sm:$0xff]
        %v1410 = vld [vmem:[#allocation2 + $0x270] sm:$0xff]
        %v1411 = vld [vmem:[#allocation2 + $0x278] sm:$0xff]
        %v1412 = vld [vmem:[#allocation2 + $0x280] sm:$0xff]
        %v1413 = vld [vmem:[#allocation2 + $0x288] sm:$0xff]
        %v1414 = vld [vmem:[#allocation2 + $0x290] sm:$0xff]
        %v1415 = vld [vmem:[#allocation2 + $0x298] sm:$0xff]
        %v1416 = vld [vmem:[#allocation2 + $0x2a0] sm:$0xff]
        %v1417 = vld [vmem:[#allocation2 + $0x2a8] sm:$0xff]
        %v1418 = vld [vmem:[#allocation2 + $0x2b0] sm:$0xff]
        %v1419 = vld [vmem:[#allocation2 + $0x2b8] sm:$0xff]
        %v1420 = vld [vmem:[#allocation2 + $0x2c0] sm:$0xff]
        %v1421 = vld [vmem:[#allocation2 + $0x2c8] sm:$0xff]
        %v1422 = vld [vmem:[#allocation2 + $0x2d0] sm:$0xff]
        %v1423 = vld [vmem:[#allocation2 + $0x2d8] sm:$0xff]
        %v1424 = vld [vmem:[#allocation2 + $0x2e0] sm:$0xff]
        %v1425 = vld [vmem:[#allocation2 + $0x2e8] sm:$0xff]
        %v1426 = vld [vmem:[#allocation2 + $0x2f0] sm:$0xff]
        %v1427 = vld [vmem:[#allocation2 + $0x2f8] sm:$0xff]
        %v1428 = vld [vmem:[#allocation2 + $0x300] sm:$0xff]
        %v1429 = vld [vmem:[#allocation2 + $0x308] sm:$0xff]
        %v1430 = vld [vmem:[#allocation2 + $0x310] sm:$0xff]
        %v1431 = vld [vmem:[#allocation2 + $0x318] sm:$0xff]
        %v1432 = vld [vmem:[#allocation2 + $0x320] sm:$0xff]
        %v1433 = vld [vmem:[#allocation2 + $0x328] sm:$0xff]
        %vm1434 = vcmask 195584
        %v1436 = vsel %vm1434, %v1271, 0
        %v1439 = vsel %vm1434, %v1275, 0
        %v1442 = vsel %vm1434, %v1279, 0
        %v1445 = vsel %vm1434, %v1283, 0
        %v1448 = vsel %vm1434, %v1287, 0
        %v1451 = vsel %vm1434, %v1291, 0
        %v1454 = vsel %vm1434, %v1295, 0
        %v1457 = vsel %vm1434, %v1299, 0
        %v1460 = vsel %vm1434, %v1303, 0
        %v1463 = vsel %vm1434, %v1307, 0
        %v1466 = vsel %vm1434, %v1311, 0
        %v1469 = vsel %vm1434, %v1315, 0
        %v1472 = vsel %vm1434, %v1319, 0
        %v1475 = vsel %vm1434, %v1323, 0
        %v1478 = vsel %vm1434, %v1327, 0
        %v1481 = vsel %vm1434, %v1331, 0
        %1483 = vmatprep.subr.mxu0 %v1333
        %1484 = vmatpush1.msra.mxu0 %v1332
        %1485 = vmatprep.subr.mxu0 %v1335
        %1486 = vmatpush1.msra.mxu0 %v1334
        %1487 = vmatprep.subr.mxu0 %v1337
        %1488 = vmatpush1.msra.mxu0 %v1336
        %1489 = vmatprep.subr.mxu0 %v1339
        %1490 = vmatpush1.msra.mxu0 %v1338
        %1491 = vmatprep.subr.mxu0 %v1341
        %1492 = vmatpush1.msra.mxu0 %v1340
        %1493 = vmatprep.subr.mxu0 %v1343
        %1494 = vmatpush1.msra.mxu0 %v1342
        %1495 = vmatprep.subr.mxu0 %v1345
        %1496 = vmatpush1.msra.mxu0 %v1344
        %1497 = vmatprep.subr.mxu0 %v1347
        %1498 = vmatpush1.msra.mxu0 %v1346
        %1499 = vmatprep.subr.mxu0 %v1349
        %1500 = vmatpush1.msra.mxu0 %v1348
        %1501 = vmatprep.subr.mxu0 %v1351
        %1502 = vmatpush1.msra.mxu0 %v1350
        %1503 = vmatprep.subr.mxu0 %v1353
        %1504 = vmatpush1.msra.mxu0 %v1352
        %1505 = vmatprep.subr.mxu0 %v1355
        %1506 = vmatpush1.msra.mxu0 %v1354
        %1507 = vmatprep.subr.mxu0 %v1357
        %1508 = vmatpush1.msra.mxu0 %v1356
        %1509 = vmatprep.subr.mxu0 %v1359
        %1510 = vmatpush1.msra.mxu0 %v1358
        %1511 = vmatprep.subr.mxu0 %v1361
        %1512 = vmatpush1.msra.mxu0 %v1360
        %1513 = vmatprep.subr.mxu0 %v1363
        %1514 = vmatpush1.msra.mxu0 %v1362
        %1515 = vmatprep.subr.mxu0 %v1365
        %1516 = vmatpush1.msra.mxu0 %v1364
        %1517 = vmatprep.subr.mxu0 %v1367
        %1518 = vmatpush1.msra.mxu0 %v1366
        %1519 = vmatprep.subr.mxu0 %v1369
        %1520 = vmatpush1.msra.mxu0 %v1368
        %1521 = vmatprep.subr.mxu0 %v1371
        %1522 = vmatpush1.msra.mxu0 %v1370
        %1523 = vmatprep.subr.mxu0 %v1373
        %1524 = vmatpush1.msra.mxu0 %v1372
        %1525 = vmatprep.subr.mxu0 %v1375
        %1526 = vmatpush1.msra.mxu0 %v1374
        %1527 = vmatprep.subr.mxu0 %v1377
        %1528 = vmatpush1.msra.mxu0 %v1376
        %1529 = vmatprep.subr.mxu0 %v1379
        %1530 = vmatpush1.msra.mxu0 %v1378
        %1531 = vmatprep.subr.mxu0 %v1381
        %1532 = vmatpush1.msra.mxu0 %v1380
        %1533 = vmatprep.subr.mxu0 %v1383
        %1534 = vmatpush1.msra.mxu0 %v1382
        %1535 = vmatprep.subr.mxu0 %v1385
        %1536 = vmatpush1.msra.mxu0 %v1384
        %1537 = vmatprep.subr.mxu0 %v1387
        %1538 = vmatpush1.msra.mxu0 %v1386
        %1539 = vmatprep.subr.mxu0 %v1389
        %1540 = vmatpush1.msra.mxu0 %v1388
        %1541 = vmatprep.subr.mxu0 %v1391
        %1542 = vmatpush1.msra.mxu0 %v1390
        %1543 = vmatprep.subr.mxu0 %v1393
        %1544 = vmatpush1.msra.mxu0 %v1392
        %1545 = vmatprep.subr.mxu0 %v1395
        %1546 = vmatpush1.msra.mxu0 %v1394
        %1547 = vmatprep.mubr.f32.mxu0 %v1269
        %1548 = vmatmul.mubr.f32.gmra.mrb[0].mxu0 %v1268
        %v1549 = vpop.f32.mrb[0].mxu0
        %v1550 = vadd.f32 0.0, %v1549
        %v1551 = vpop.f32.mrb[0].mxu0
        %v1552 = vadd.f32 0.0, %v1551
        %1553 = vmatprep.mubr.f32.mxu0 %v1273
        %1554 = vmatmul.mubr.f32.gmra.mrb[0].mxu0 %v1272
        %v1555 = vpop.f32.mrb[0].mxu0
        %v1556 = vadd.f32 0.0, %v1555
        %v1557 = vpop.f32.mrb[0].mxu0
        %v1558 = vadd.f32 0.0, %v1557
        %1559 = vmatprep.mubr.f32.mxu0 %v1277
        %1560 = vmatmul.mubr.f32.gmra.mrb[0].mxu0 %v1276
        %v1561 = vpop.f32.mrb[0].mxu0
        %v1562 = vadd.f32 0.0, %v1561
        %v1563 = vpop.f32.mrb[0].mxu0
        %v1564 = vadd.f32 0.0, %v1563
        %1565 = vmatprep.mubr.f32.mxu0 %v1281
        %1566 = vmatmul.mubr.f32.gmra.mrb[0].mxu0 %v1280
        %v1567 = vpop.f32.mrb[0].mxu0
        %v1568 = vadd.f32 0.0, %v1567
        %v1569 = vpop.f32.mrb[0].mxu0
        %v1570 = vadd.f32 0.0, %v1569
        %1571 = vmatprep.mubr.f32.mxu0 %v1285
        %1572 = vmatmul.mubr.f32.gmra.mrb[0].mxu0 %v1284
        %v1573 = vpop.f32.mrb[0].mxu0
        %v1574 = vadd.f32 0.0, %v1573
        %v1575 = vpop.f32.mrb[0].mxu0
        %v1576 = vadd.f32 0.0, %v1575
        %1577 = vmatprep.mubr.f32.mxu0 %v1289
        %1578 = vmatmul.mubr.f32.gmra.mrb[0].mxu0 %v1288
        %v1579 = vpop.f32.mrb[0].mxu0
        %v1580 = vadd.f32 0.0, %v1579
        %v1581 = vpop.f32.mrb[0].mxu0
        %v1582 = vadd.f32 0.0, %v1581
        %1583 = vmatprep.mubr.f32.mxu0 %v1293
        %1584 = vmatmul.mubr.f32.gmra.mrb[0].mxu0 %v1292
        %v1585 = vpop.f32.mrb[0].mxu0
        %v1586 = vadd.f32 0.0, %v1585
        %v1587 = vpop.f32.mrb[0].mxu0
        %v1588 = vadd.f32 0.0, %v1587
        %1589 = vmatprep.mubr.f32.mxu0 %v1297
        %1590 = vmatmul.mubr.f32.gmra.mrb[0].mxu0 %v1296
        %v1591 = vpop.f32.mrb[0].mxu0
        %v1592 = vadd.f32 0.0, %v1591
        %v1593 = vpop.f32.mrb[0].mxu0
        %v1594 = vadd.f32 0.0, %v1593
        %1595 = vmatprep.mubr.f32.mxu0 %v1301
        %1596 = vmatmul.mubr.f32.gmra.mrb[0].mxu0 %v1300
        %v1597 = vpop.f32.mrb[0].mxu0
        %v1598 = vadd.f32 0.0, %v1597
        %v1599 = vpop.f32.mrb[0].mxu0
        %v1600 = vadd.f32 0.0, %v1599
        %1601 = vmatprep.mubr.f32.mxu0 %v1305
        %1602 = vmatmul.mubr.f32.gmra.mrb[0].mxu0 %v1304
        %v1603 = vpop.f32.mrb[0].mxu0
        %v1604 = vadd.f32 0.0, %v1603
        %v1605 = vpop.f32.mrb[0].mxu0
        %v1606 = vadd.f32 0.0, %v1605
        %1607 = vmatprep.mubr.f32.mxu0 %v1309
        %1608 = vmatmul.mubr.f32.gmra.mrb[0].mxu0 %v1308
        %v1609 = vpop.f32.mrb[0].mxu0
        %v1610 = vadd.f32 0.0, %v1609
        %v1611 = vpop.f32.mrb[0].mxu0
        %v1612 = vadd.f32 0.0, %v1611
        %1613 = vmatprep.mubr.f32.mxu0 %v1313
        %1614 = vmatmul.mubr.f32.gmra.mrb[0].mxu0 %v1312
        %v1615 = vpop.f32.mrb[0].mxu0
        %v1616 = vadd.f32 0.0, %v1615
        %v1617 = vpop.f32.mrb[0].mxu0
        %v1618 = vadd.f32 0.0, %v1617
        %1619 = vmatprep.mubr.f32.mxu0 %v1317
        %1620 = vmatmul.mubr.f32.gmra.mrb[0].mxu0 %v1316
        %v1621 = vpop.f32.mrb[0].mxu0
        %v1622 = vadd.f32 0.0, %v1621
        %v1623 = vpop.f32.mrb[0].mxu0
        %v1624 = vadd.f32 0.0, %v1623
        %1625 = vmatprep.mubr.f32.mxu0 %v1321
        %1626 = vmatmul.mubr.f32.gmra.mrb[0].mxu0 %v1320
        %v1627 = vpop.f32.mrb[0].mxu0
        %v1628 = vadd.f32 0.0, %v1627
        %v1629 = vpop.f32.mrb[0].mxu0
        %v1630 = vadd.f32 0.0, %v1629
        %1631 = vmatprep.mubr.f32.mxu0 %v1325
        %1632 = vmatmul.mubr.f32.gmra.mrb[0].mxu0 %v1324
        %v1633 = vpop.f32.mrb[0].mxu0
        %v1634 = vadd.f32 0.0, %v1633
        %v1635 = vpop.f32.mrb[0].mxu0
        %v1636 = vadd.f32 0.0, %v1635
        %1637 = vmatprep.mubr.f32.mxu0 %v1329
        %1638 = vmatmul.mubr.f32.gmra.mrb[0].mxu0 %v1328
        %v1639 = vpop.f32.mrb[0].mxu0
        %v1640 = vadd.f32 0.0, %v1639
        %v1641 = vpop.f32.mrb[0].mxu0
        %v1642 = vadd.f32 0.0, %v1641
        %1643 = vdwg.mxu0
        %1644 = vmatprep.subr.mxu0 %v1397
        %1645 = vmatpush1.msra.mxu0 %v1396
        %1646 = vmatprep.subr.mxu0 %v1399
        %1647 = vmatpush1.msra.mxu0 %v1398
        %1648 = vmatprep.subr.mxu0 %v1401
        %1649 = vmatpush1.msra.mxu0 %v1400
        %1650 = vmatprep.subr.mxu0 %v1403
        %1651 = vmatpush1.msra.mxu0 %v1402
        %1652 = vmatprep.subr.mxu0 %v1405
        %1653 = vmatpush1.msra.mxu0 %v1404
        %1654 = vmatprep.subr.mxu0 %v1407
        %1655 = vmatpush1.msra.mxu0 %v1406
        %1656 = vmatprep.subr.mxu0 %v1409
        %1657 = vmatpush1.msra.mxu0 %v1408
        %1658 = vmatprep.subr.mxu0 %v1411
        %1659 = vmatpush1.msra.mxu0 %v1410
        %1660 = vmatprep.subr.mxu0 %v1413
        %1661 = vmatpush1.msra.mxu0 %v1412
        %1662 = vmatprep.subr.mxu0 %v1415
        %1663 = vmatpush1.msra.mxu0 %v1414
        %1664 = vmatprep.subr.mxu0 %v1417
        %1665 = vmatpush1.msra.mxu0 %v1416
        %1666 = vmatprep.subr.mxu0 %v1419
        %1667 = vmatpush1.msra.mxu0 %v1418
        %1668 = vmatprep.subr.mxu0 %v1421
        %1669 = vmatpush1.msra.mxu0 %v1420
        %1670 = vmatprep.subr.mxu0 %v1423
        %1671 = vmatpush1.msra.mxu0 %v1422
        %1672 = vmatprep.subr.mxu0 %v1425
        %1673 = vmatpush1.msra.mxu0 %v1424
        %1674 = vmatprep.subr.mxu0 %v1427
        %1675 = vmatpush1.msra.mxu0 %v1426
        %1676 = vmatprep.subr.mxu0 %v1429
        %1677 = vmatpush1.msra.mxu0 %v1428
        %1678 = vmatprep.subr.mxu0 %v1431
        %1679 = vmatpush1.msra.mxu0 %v1430
        %1680 = vmatprep.subr.mxu0 %v1433
        %1681 = vmatpush1.msra.mxu0 %v1432
        %1682 = vmatprep.subr.mxu0 0.0
        %1683 = vmatpush1.msra.mxu0 0.0
        %1684 = vmatprep.subr.mxu0 0.0
        %1685 = vmatpush1.msra.mxu0 0.0
        %1686 = vmatprep.subr.mxu0 0.0
        %1687 = vmatpush1.msra.mxu0 0.0
        %1688 = vmatprep.subr.mxu0 0.0
        %1689 = vmatpush1.msra.mxu0 0.0
        %1690 = vmatprep.subr.mxu0 0.0
        %1691 = vmatpush1.msra.mxu0 0.0
        %1692 = vmatprep.subr.mxu0 0.0
        %1693 = vmatpush1.msra.mxu0 0.0
        %1694 = vmatprep.subr.mxu0 0.0
        %1695 = vmatpush1.msra.mxu0 0.0
        %1696 = vmatprep.subr.mxu0 0.0
        %1697 = vmatpush1.msra.mxu0 0.0
        %1698 = vmatprep.subr.mxu0 0.0
        %1699 = vmatpush1.msra.mxu0 0.0
        %1700 = vmatprep.subr.mxu0 0.0
        %1701 = vmatpush1.msra.mxu0 0.0
        %1702 = vmatprep.subr.mxu0 0.0
        %1703 = vmatpush1.msra.mxu0 0.0
        %1704 = vmatprep.subr.mxu0 0.0
        %1705 = vmatpush1.msra.mxu0 0.0
        %1706 = vmatprep.subr.mxu0 0.0
        %1707 = vmatpush1.msra.mxu0 0.0
        %1708 = vmatprep.mubr.f32.mxu0 %v1436
        %1709 = vmatmul.mubr.f32.gmra.mrb[0].mxu0 %v1270
        %v1710 = vpop.f32.mrb[0].mxu0
        %v1711 = vadd.f32 %v1550, %v1710
        %v1712 = vpop.f32.mrb[0].mxu0
        %v1713 = vadd.f32 %v1552, %v1712
        %1714 = vmatprep.mubr.f32.mxu0 %v1439
        %1715 = vmatmul.mubr.f32.gmra.mrb[0].mxu0 %v1274
        %v1716 = vpop.f32.mrb[0].mxu0
        %v1717 = vadd.f32 %v1556, %v1716
        %v1718 = vpop.f32.mrb[0].mxu0
        %v1719 = vadd.f32 %v1558, %v1718
        %1720 = vmatprep.mubr.f32.mxu0 %v1442
        %1721 = vmatmul.mubr.f32.gmra.mrb[0].mxu0 %v1278
        %v1722 = vpop.f32.mrb[0].mxu0
        %v1723 = vadd.f32 %v1562, %v1722
        %v1724 = vpop.f32.mrb[0].mxu0
        %v1725 = vadd.f32 %v1564, %v1724
        %1726 = vmatprep.mubr.f32.mxu0 %v1445
        %1727 = vmatmul.mubr.f32.gmra.mrb[0].mxu0 %v1282
        %v1728 = vpop.f32.mrb[0].mxu0
        %v1729 = vadd.f32 %v1568, %v1728
        %v1730 = vpop.f32.mrb[0].mxu0
        %v1731 = vadd.f32 %v1570, %v1730
        %1732 = vmatprep.mubr.f32.mxu0 %v1448
        %1733 = vmatmul.mubr.f32.gmra.mrb[0].mxu0 %v1286
        %v1734 = vpop.f32.mrb[0].mxu0
        %v1735 = vadd.f32 %v1574, %v1734
        %v1736 = vpop.f32.mrb[0].mxu0
        %v1737 = vadd.f32 %v1576, %v1736
        %1738 = vmatprep.mubr.f32.mxu0 %v1451
        %1739 = vmatmul.mubr.f32.gmra.mrb[0].mxu0 %v1290
        %v1740 = vpop.f32.mrb[0].mxu0
        %v1741 = vadd.f32 %v1580, %v1740
        %v1742 = vpop.f32.mrb[0].mxu0
        %v1743 = vadd.f32 %v1582, %v1742
        %1744 = vmatprep.mubr.f32.mxu0 %v1454
        %1745 = vmatmul.mubr.f32.gmra.mrb[0].mxu0 %v1294
        %v1746 = vpop.f32.mrb[0].mxu0
        %v1747 = vadd.f32 %v1586, %v1746
        %v1748 = vpop.f32.mrb[0].mxu0
        %v1749 = vadd.f32 %v1588, %v1748
        %1750 = vmatprep.mubr.f32.mxu0 %v1457
        %1751 = vmatmul.mubr.f32.gmra.mrb[0].mxu0 %v1298
        %v1752 = vpop.f32.mrb[0].mxu0
        %v1753 = vadd.f32 %v1592, %v1752
        %v1754 = vpop.f32.mrb[0].mxu0
        %v1755 = vadd.f32 %v1594, %v1754
        %1756 = vmatprep.mubr.f32.mxu0 %v1460
        %1757 = vmatmul.mubr.f32.gmra.mrb[0].mxu0 %v1302
        %v1758 = vpop.f32.mrb[0].mxu0
        %v1759 = vadd.f32 %v1598, %v1758
        %v1760 = vpop.f32.mrb[0].mxu0
        %v1761 = vadd.f32 %v1600, %v1760
        %1762 = vmatprep.mubr.f32.mxu0 %v1463
        %1763 = vmatmul.mubr.f32.gmra.mrb[0].mxu0 %v1306
        %v1764 = vpop.f32.mrb[0].mxu0
        %v1765 = vadd.f32 %v1604, %v1764
        %v1766 = vpop.f32.mrb[0].mxu0
        %v1767 = vadd.f32 %v1606, %v1766
        %1768 = vmatprep.mubr.f32.mxu0 %v1466
        %1769 = vmatmul.mubr.f32.gmra.mrb[0].mxu0 %v1310
        %v1770 = vpop.f32.mrb[0].mxu0
        %v1771 = vadd.f32 %v1610, %v1770
        %v1772 = vpop.f32.mrb[0].mxu0
        %v1773 = vadd.f32 %v1612, %v1772
        %1774 = vmatprep.mubr.f32.mxu0 %v1469
        %1775 = vmatmul.mubr.f32.gmra.mrb[0].mxu0 %v1314
        %v1776 = vpop.f32.mrb[0].mxu0
        %v1777 = vadd.f32 %v1616, %v1776
        %v1778 = vpop.f32.mrb[0].mxu0
        %v1779 = vadd.f32 %v1618, %v1778
        %1780 = vmatprep.mubr.f32.mxu0 %v1472
        %1781 = vmatmul.mubr.f32.gmra.mrb[0].mxu0 %v1318
        %v1782 = vpop.f32.mrb[0].mxu0
        %v1783 = vadd.f32 %v1622, %v1782
        %v1784 = vpop.f32.mrb[0].mxu0
        %v1785 = vadd.f32 %v1624, %v1784
        %1786 = vmatprep.mubr.f32.mxu0 %v1475
        %1787 = vmatmul.mubr.f32.gmra.mrb[0].mxu0 %v1322
        %v1788 = vpop.f32.mrb[0].mxu0
        %v1789 = vadd.f32 %v1628, %v1788
        %v1790 = vpop.f32.mrb[0].mxu0
        %v1791 = vadd.f32 %v1630, %v1790
        %1792 = vmatprep.mubr.f32.mxu0 %v1478
        %1793 = vmatmul.mubr.f32.gmra.mrb[0].mxu0 %v1326
        %v1794 = vpop.f32.mrb[0].mxu0
        %v1795 = vadd.f32 %v1634, %v1794
        %v1796 = vpop.f32.mrb[0].mxu0
        %v1797 = vadd.f32 %v1636, %v1796
        %1798 = vmatprep.mubr.f32.mxu0 %v1481
        %1799 = vmatmul.mubr.f32.gmra.mrb[0].mxu0 %v1330
        %v1800 = vpop.f32.mrb[0].mxu0
        %v1801 = vadd.f32 %v1640, %v1800
        %v1802 = vpop.f32.mrb[0].mxu0
        %v1803 = vadd.f32 %v1642, %v1802
        %1804 = vdwg.mxu0
        %1805 = vst [vmem:[%s180] sm:$0xff] %v1711
        %1806 = vst [vmem:[%s180 + $0x8] sm:$0xff] %v1713
        %1807 = vst [vmem:[%s180 + $0x10] sm:$0xff] %v1717
        %1808 = vst [vmem:[%s180 + $0x18] sm:$0xff] %v1719
        %1809 = vst [vmem:[%s180 + $0x20] sm:$0xff] %v1723
        %1810 = vst [vmem:[%s180 + $0x28] sm:$0xff] %v1725
        %1811 = vst [vmem:[%s180 + $0x30] sm:$0xff] %v1729
        %1812 = vst [vmem:[%s180 + $0x38] sm:$0xff] %v1731
        %1813 = vst [vmem:[%s180 + $0x40] sm:$0xff] %v1735
        %1814 = vst [vmem:[%s180 + $0x48] sm:$0xff] %v1737
        %1815 = vst [vmem:[%s180 + $0x50] sm:$0xff] %v1741
        %1816 = vst [vmem:[%s180 + $0x58] sm:$0xff] %v1743
        %1817 = vst [vmem:[%s180 + $0x60] sm:$0xff] %v1747
        %1818 = vst [vmem:[%s180 + $0x68] sm:$0xff] %v1749
        %1819 = vst [vmem:[%s180 + $0x70] sm:$0xff] %v1753
        %1820 = vst [vmem:[%s180 + $0x78] sm:$0xff] %v1755
        %1821 = vst [vmem:[%s180 + $0x80] sm:$0xff] %v1759
        %1822 = vst [vmem:[%s180 + $0x88] sm:$0xff] %v1761
        %1823 = vst [vmem:[%s180 + $0x90] sm:$0xff] %v1765
        %1824 = vst [vmem:[%s180 + $0x98] sm:$0xff] %v1767
        %1825 = vst [vmem:[%s180 + $0xa0] sm:$0xff] %v1771
        %1826 = vst [vmem:[%s180 + $0xa8] sm:$0xff] %v1773
        %1827 = vst [vmem:[%s180 + $0xb0] sm:$0xff] %v1777
        %1828 = vst [vmem:[%s180 + $0xb8] sm:$0xff] %v1779
        %1829 = vst [vmem:[%s180 + $0xc0] sm:$0xff] %v1783
        %1830 = vst [vmem:[%s180 + $0xc8] sm:$0xff] %v1785
        %1831 = vst [vmem:[%s180 + $0xd0] sm:$0xff] %v1789
        %1832 = vst [vmem:[%s180 + $0xd8] sm:$0xff] %v1791
        %1833 = vst [vmem:[%s180 + $0xe0] sm:$0xff] %v1795
        %1834 = vst [vmem:[%s180 + $0xe8] sm:$0xff] %v1797
        %1835 = vst [vmem:[%s180 + $0xf0] sm:$0xff] %v1801
        %1836 = vst [vmem:[%s180 + $0xf8] sm:$0xff] %v1803
        %v1837 = vadd.f32 %v1711, %v1713
        %1838 = vadd.xlane.f32.xlu0 %v1837
        %v1839 = vpop.xlane.xlu0 %1838
        %v1840 = vadd.f32 %v1717, %v1719
        %1841 = vadd.xlane.f32.xlu0 %v1840
        %v1842 = vpop.xlane.xlu0 %1841
        %v1843 = vadd.f32 %v1723, %v1725
        %1844 = vadd.xlane.f32.xlu0 %v1843
        %v1845 = vpop.xlane.xlu0 %1844
        %v1846 = vadd.f32 %v1729, %v1731
        %1847 = vadd.xlane.f32.xlu0 %v1846
        %v1848 = vpop.xlane.xlu0 %1847
        %v1849 = vadd.f32 %v1735, %v1737
        %1850 = vadd.xlane.f32.xlu0 %v1849
        %v1851 = vpop.xlane.xlu0 %1850
        %v1852 = vadd.f32 %v1741, %v1743
        %1853 = vadd.xlane.f32.xlu0 %v1852
        %v1854 = vpop.xlane.xlu0 %1853
        %v1855 = vadd.f32 %v1747, %v1749
        %1856 = vadd.xlane.f32.xlu0 %v1855
        %v1857 = vpop.xlane.xlu0 %1856
        %v1858 = vadd.f32 %v1753, %v1755
        %1859 = vadd.xlane.f32.xlu0 %v1858
        %v1860 = vpop.xlane.xlu0 %1859
        %v1861 = vadd.f32 %v1759, %v1761
        %1862 = vadd.xlane.f32.xlu0 %v1861
        %v1863 = vpop.xlane.xlu0 %1862
        %v1864 = vadd.f32 %v1765, %v1767
        %1865 = vadd.xlane.f32.xlu0 %v1864
        %v1866 = vpop.xlane.xlu0 %1865
        %v1867 = vadd.f32 %v1771, %v1773
        %1868 = vadd.xlane.f32.xlu0 %v1867
        %v1869 = vpop.xlane.xlu0 %1868
        %v1870 = vadd.f32 %v1777, %v1779
        %1871 = vadd.xlane.f32.xlu0 %v1870
        %v1872 = vpop.xlane.xlu0 %1871
        %v1873 = vadd.f32 %v1783, %v1785
        %1874 = vadd.xlane.f32.xlu0 %v1873
        %v1875 = vpop.xlane.xlu0 %1874
        %v1876 = vadd.f32 %v1789, %v1791
        %1877 = vadd.xlane.f32.xlu0 %v1876
        %v1878 = vpop.xlane.xlu0 %1877
        %v1879 = vadd.f32 %v1795, %v1797
        %1880 = vadd.xlane.f32.xlu0 %v1879
        %v1881 = vpop.xlane.xlu0 %1880
        %v1882 = vadd.f32 %v1801, %v1803
        %1883 = vadd.xlane.f32.xlu0 %v1882
        %v1884 = vpop.xlane.xlu0 %1883
        %v1885 = vmul.f32 %v1711, %v1711
        %v1886 = vmul.f32 %v1713, %v1713
        %v1887 = vmul.f32 %v1717, %v1717
        %v1888 = vmul.f32 %v1719, %v1719
        %v1889 = vmul.f32 %v1723, %v1723
        %v1890 = vmul.f32 %v1725, %v1725
        %v1891 = vmul.f32 %v1729, %v1729
        %v1892 = vmul.f32 %v1731, %v1731
        %v1893 = vmul.f32 %v1735, %v1735
        %v1894 = vmul.f32 %v1737, %v1737
        %v1895 = vmul.f32 %v1741, %v1741
        %v1896 = vmul.f32 %v1743, %v1743
        %v1897 = vmul.f32 %v1747, %v1747
        %v1898 = vmul.f32 %v1749, %v1749
        %v1899 = vmul.f32 %v1753, %v1753
        %v1900 = vmul.f32 %v1755, %v1755
        %v1901 = vmul.f32 %v1759, %v1759
        %v1902 = vmul.f32 %v1761, %v1761
        %v1903 = vmul.f32 %v1765, %v1765
        %v1904 = vmul.f32 %v1767, %v1767
        %v1905 = vmul.f32 %v1771, %v1771
        %v1906 = vmul.f32 %v1773, %v1773
        %v1907 = vmul.f32 %v1777, %v1777
        %v1908 = vmul.f32 %v1779, %v1779
        %v1909 = vmul.f32 %v1783, %v1783
        %v1910 = vmul.f32 %v1785, %v1785
        %v1911 = vmul.f32 %v1789, %v1789
        %v1912 = vmul.f32 %v1791, %v1791
        %v1913 = vmul.f32 %v1795, %v1795
        %v1914 = vmul.f32 %v1797, %v1797
        %v1915 = vmul.f32 %v1801, %v1801
        %v1916 = vmul.f32 %v1803, %v1803
        %v1917 = vadd.f32 %v1885, %v1886
        %1918 = vadd.xlane.f32.xlu0 %v1917
        %v1919 = vpop.xlane.xlu0 %1918
        %v1920 = vadd.f32 %v1887, %v1888
        %1921 = vadd.xlane.f32.xlu0 %v1920
        %v1922 = vpop.xlane.xlu0 %1921
        %v1923 = vadd.f32 %v1889, %v1890
        %1924 = vadd.xlane.f32.xlu0 %v1923
        %v1925 = vpop.xlane.xlu0 %1924
        %v1926 = vadd.f32 %v1891, %v1892
        %1927 = vadd.xlane.f32.xlu0 %v1926
        %v1928 = vpop.xlane.xlu0 %1927
        %v1929 = vadd.f32 %v1893, %v1894
        %1930 = vadd.xlane.f32.xlu0 %v1929
        %v1931 = vpop.xlane.xlu0 %1930
        %v1932 = vadd.f32 %v1895, %v1896
        %1933 = vadd.xlane.f32.xlu0 %v1932
        %v1934 = vpop.xlane.xlu0 %1933
        %v1935 = vadd.f32 %v1897, %v1898
        %1936 = vadd.xlane.f32.xlu0 %v1935
        %v1937 = vpop.xlane.xlu0 %1936
        %v1938 = vadd.f32 %v1899, %v1900
        %1939 = vadd.xlane.f32.xlu0 %v1938
        %v1940 = vpop.xlane.xlu0 %1939
        %v1941 = vadd.f32 %v1901, %v1902
        %1942 = vadd.xlane.f32.xlu0 %v1941
        %v1943 = vpop.xlane.xlu0 %1942
        %v1944 = vadd.f32 %v1903, %v1904
        %1945 = vadd.xlane.f32.xlu0 %v1944
        %v1946 = vpop.xlane.xlu0 %1945
        %v1947 = vadd.f32 %v1905, %v1906
        %1948 = vadd.xlane.f32.xlu0 %v1947
        %v1949 = vpop.xlane.xlu0 %1948
        %v1950 = vadd.f32 %v1907, %v1908
        %1951 = vadd.xlane.f32.xlu0 %v1950
        %v1952 = vpop.xlane.xlu0 %1951
        %v1953 = vadd.f32 %v1909, %v1910
        %1954 = vadd.xlane.f32.xlu0 %v1953
        %v1955 = vpop.xlane.xlu0 %1954
        %v1956 = vadd.f32 %v1911, %v1912
        %1957 = vadd.xlane.f32.xlu0 %v1956
        %v1958 = vpop.xlane.xlu0 %1957
        %v1959 = vadd.f32 %v1913, %v1914
        %1960 = vadd.xlane.f32.xlu0 %v1959
        %v1961 = vpop.xlane.xlu0 %1960
        %v1962 = vadd.f32 %v1915, %v1916
        %1963 = vadd.xlane.f32.xlu0 %v1962
        %v1964 = vpop.xlane.xlu0 %1963
        %vm1965 = vcmask 7168
        %v1966 = vsel %vm1965, %v1839, %v1919
        %v1967 = vsel %vm1965, %v1842, %v1922
        %v1968 = vsel %vm1965, %v1845, %v1925
        %v1969 = vsel %vm1965, %v1848, %v1928
        %v1970 = vsel %vm1965, %v1851, %v1931
        %v1971 = vsel %vm1965, %v1854, %v1934
        %v1972 = vsel %vm1965, %v1857, %v1937
        %v1973 = vsel %vm1965, %v1860, %v1940
        %v1974 = vsel %vm1965, %v1863, %v1943
        %v1975 = vsel %vm1965, %v1866, %v1946
        %v1976 = vsel %vm1965, %v1869, %v1949
        %v1977 = vsel %vm1965, %v1872, %v1952
        %v1978 = vsel %vm1965, %v1875, %v1955
        %v1979 = vsel %vm1965, %v1878, %v1958
        %v1980 = vsel %vm1965, %v1881, %v1961
        %v1981 = vsel %vm1965, %v1884, %v1964
        %vm1982 = vcmask 15360
        %1983 = vst.msk [vmem:[%s206] sm:$0xff] %vm1982, %v1966
        %1984 = vst.msk [vmem:[%s206 + $0x8] sm:$0xff] %vm1982, %v1967
        %1985 = vst.msk [vmem:[%s206 + $0x10] sm:$0xff] %vm1982, %v1968
        %1986 = vst.msk [vmem:[%s206 + $0x18] sm:$0xff] %vm1982, %v1969
        %1987 = vst.msk [vmem:[%s206 + $0x20] sm:$0xff] %vm1982, %v1970
        %1988 = vst.msk [vmem:[%s206 + $0x28] sm:$0xff] %vm1982, %v1971
        %1989 = vst.msk [vmem:[%s206 + $0x30] sm:$0xff] %vm1982, %v1972
        %1990 = vst.msk [vmem:[%s206 + $0x38] sm:$0xff] %vm1982, %v1973
        %1991 = vst.msk [vmem:[%s206 + $0x40] sm:$0xff] %vm1982, %v1974
        %1992 = vst.msk [vmem:[%s206 + $0x48] sm:$0xff] %vm1982, %v1975
        %1993 = vst.msk [vmem:[%s206 + $0x50] sm:$0xff] %vm1982, %v1976
        %1994 = vst.msk [vmem:[%s206 + $0x58] sm:$0xff] %vm1982, %v1977
        %1995 = vst.msk [vmem:[%s206 + $0x60] sm:$0xff] %vm1982, %v1978
        %1996 = vst.msk [vmem:[%s206 + $0x68] sm:$0xff] %vm1982, %v1979
        %1997 = vst.msk [vmem:[%s206 + $0x70] sm:$0xff] %vm1982, %v1980
        %1998 = vst.msk [vmem:[%s206 + $0x78] sm:$0xff] %vm1982, %v1981
        %s1999 = sand.u32 %s87, 1
        %s2000 = scalar_lea.sflag [#allocation4], %s1999
        %s2001 = sand.u32 %s87, 1
        %s2002 = smul.addr %s2001, 256
        %s2003 = scalar_lea.vmem [#allocation3], %s2002
        %p2004 = scmp.lt.s32.totalorder %s22, 1
        %s2005 = scalar_select %p2004, %s22, 1
        %p2006 = scmp.lt.s32.totalorder %s23, 1
        %s2007 = scalar_select %p2006, %s23, 1
        %s2008 = smul.addr %s2007, 16
        %s2009 = smul.addr %s2005, 32
        %s2010 = sadd.s32 %s2008, %s2009
        %s2011 = smul.addr %s2010, 8
        %s2012 = scalar_lea.vmem %s3, %s2011
        // Predicated region
        $region29: #{tpu_custom_call.1} parent=27 // pred_check
          %p2013 = pneg %p97
        $region30: #{tpu_custom_call.1} parent=27 // pred_check_branch
          %2015 = sbr.rel (%p2013) target = $region32
        $region31: #{tpu_custom_call.1} parent=27 // pred_region
          %s2016 = smul.u32 8, %s23
          %s2018 = ssub.s32 4096, 4096
          %2019 = vsyncadd %s2000, %s2018
          %s2020 = smul.addr %s2016, 4
          %s2021 = smul.addr %s22, 64
          %s2022 = sadd.s32 %s2020, %s2021
          %s2023 = smul.addr %s2022, 128
          %s2024 = scalar_lea.hbm %s2, %s2023
          %s2025 = sshll.u32 %s2003, 4
          %s2026 = int_to_ptr.vmem [resolvable:$true] %s2025
          %2031 = dma.vmem_to_hbm [thread:$0]  %s2026, 4096, %s2024, %s2000, 256, 256, 16
        $region32: #{tpu_custom_call.1} parent=27 // pred_fallthru
          _
        // Predicated region
        $region33: #{tpu_custom_call.1} parent=27 // pred_check
          %p2032 = pneg %p125
        $region34: #{tpu_custom_call.1} parent=27 // pred_check_branch
          %2034 = sbr.rel (%p2032) target = $region36
        $region35: #{tpu_custom_call.1} parent=27 // pred_region
          _
        $region36: #{tpu_custom_call.1} parent=27 // pred_fallthru
          _
      $region28: #{tpu_custom_call.1} parent=5 // pred_fallthru
        _
      %p2035 = scmp.le.s32.totalorder 2, %s13
      // Predicated region
      $region37: #{tpu_custom_call.1} parent=5 // pred_check
        %p2036 = pneg %p2035
      $region38: #{tpu_custom_call.1} parent=5 // pred_check_branch
        %2038 = sbr.rel (%p2036) target = $region40
      $region39: #{tpu_custom_call.1} parent=5 // pred_region
        %s2039 = ssub.s32 %s13, 2
        // Predicated region
        $region41: #{tpu_custom_call.1} parent=39 // pred_check
          %p2040 = pneg %p103
        $region42: #{tpu_custom_call.1} parent=39 // pred_check_branch
          %2042 = sbr.rel (%p2040) target = $region44
        $region43: #{tpu_custom_call.1} parent=39 // pred_region
          %s2043 = sand.u32 %s88, 1
          %s2044 = scalar_lea.sflag [#allocation4], %s2043
          %s2045 = sand.u32 %s88, 1
          %s2046 = smul.addr %s2045, 256
          %s2047 = scalar_lea.vmem [#allocation3], %s2046
          %2048 = dma.done %s2044, 4096
        $region44: #{tpu_custom_call.1} parent=39 // pred_fallthru
          _
        // Predicated region
        $region45: #{tpu_custom_call.1} parent=39 // pred_check
          %p2049 = pneg %p131
        $region46: #{tpu_custom_call.1} parent=39 // pred_check_branch
          %2051 = sbr.rel (%p2049) target = $region48
        $region47: #{tpu_custom_call.1} parent=39 // pred_region
          %p2052 = scmp.lt.s32.totalorder %s24, 1
          %s2053 = scalar_select %p2052, %s24, 1
          %p2054 = scmp.lt.s32.totalorder %s25, 1
          %s2055 = scalar_select %p2054, %s25, 1
          %s2056 = smul.addr %s2055, 16
          %s2057 = smul.addr %s2053, 32
          %s2058 = sadd.s32 %s2056, %s2057
          %s2059 = smul.addr %s2058, 8
          %s2060 = scalar_lea.vmem %s3, %s2059
        $region48: #{tpu_custom_call.1} parent=39 // pred_fallthru
          _
      $region40: #{tpu_custom_call.1} parent=5 // pred_fallthru
        _
    $region6: #{tpu_custom_call.1} parent=1 // loop_footer
      %s17 = sadd.s32 1, %s13
    $region7: #{tpu_custom_call.1} parent=1 // loop_footer_branch
      %12 = sbr.rel target = $region3
    $region8: #{tpu_custom_call.1} parent=1 // loop_exit
      _
    %2061 = vsyncpa [#allocation4], 1
    %s2062 = scalar_lea.sflag [#allocation4], 1
    %2063 = vsyncpa %s2062, 1

</llo_original>
